<compile_context>
chip_gen: v6e
topology: v6e:2x2x1
jax: 0.10.0
libtpu: 0.0.40
codegen_flags: <defaults>
</compile_context>

<pallas_src>
import numpy as np
import jax
import jax.numpy as jnp
from jax.experimental import pallas as pl
from jax.experimental.pallas import tpu as pltpu

LN_EPS = 1e-5                                   # nn.LayerNorm default
PRECISION = jax.lax.Precision.HIGHEST


def _dot(a, b):
    return jnp.dot(a, b, preferred_element_type=jnp.float32, precision=PRECISION)


def _layernorm(x, gamma, beta):
    mu = jnp.mean(x, axis=-1, keepdims=True)
    var = jnp.mean(jnp.square(x - mu), axis=-1, keepdims=True)
    return (x - mu) * jax.lax.rsqrt(var + LN_EPS) * gamma + beta


# -----------------------------------------------------------------------------
# Stem + patcher kernel (all encoders and the patcher conv are linear, so they
# are folded into three lane-dense matmuls over B*S rows):
#   x0 = xcate_patched @ Wp  +  nume_patched @ Wnp  +  demo_rep @ Wdp  +  bp
# -----------------------------------------------------------------------------
def stem_patch_kernel(xcate_ref, nume_ref, demo_ref,
                      wp_ref, wnp_ref, wdp_ref, bp_ref, x0_ref):
    x0 = (_dot(xcate_ref[...], wp_ref[...])
          + _dot(nume_ref[...], wnp_ref[...])
          + _dot(demo_ref[...], wdp_ref[...])
          + bp_ref[...])
    x0_ref[...] = x0.astype(x0_ref.dtype)


# -----------------------------------------------------------------------------
# gMLP backbone kernel (grid = (depth,), residual stream kept in VMEM scratch
# as a flat (B*S, d_model) slab):
#   d==0:    x = x0                               (already patched + projected)
#   each d:  x = x + proj2( u * SGU_sp( LN(v) ) ),  u,v = gelu(LN(x) @ w1_{u,v})
#   d==last: out = head( pool @ x )               (per-batch mean as a matmul)
# -----------------------------------------------------------------------------
def gmlp_backbone_kernel(
    x0_ref,                      # (B*S, Dm)   only consumed at d == 0
    ln1_g_ref, ln1_b_ref,        # (1, 1, Dm)
    w1u_ref, b1u_ref,            # (1, Dm, F), (1, 1, F)
    w1v_ref, b1v_ref,            # (1, Dm, F), (1, 1, F)
    lns_g_ref, lns_b_ref,        # (1, 1, F)
    wsp_ref, bsp_ref,            # (1, B*S, B*S) block-diag, (1, B*S, 1)
    w2_ref, b2_ref,              # (1, F, Dm), (1, 1, Dm)
    pool_ref,                    # (B, B*S)    per-batch mean-over-patches matrix
    wh_ref, bh_ref,              # (Dm, Cout), (1, Cout)
    out_ref,                     # (B, Cout)
    x_scr,                       # VMEM scratch (B*S, Dm) f32, residual stream
):
    d = pl.program_id(0)

    @pl.when(d == 0)
    def _init():
        x_scr[...] = x0_ref[...]

    x = x_scr[...]                                           # (BS, Dm)
    xn = _layernorm(x, ln1_g_ref[0], ln1_b_ref[0])
    u = jax.nn.gelu(_dot(xn, w1u_ref[0]) + b1u_ref[0], approximate=False)
    v = jax.nn.gelu(_dot(xn, w1v_ref[0]) + b1v_ref[0], approximate=False)
    vn = _layernorm(v, lns_g_ref[0], lns_b_ref[0])
    # spatial gating: Conv1d(S, S, 1) over the patch axis, applied to all batches
    # at once via a block-diagonal weight (single MXU matmul, no per-batch loop).
    vsp = _dot(wsp_ref[0], vn) + bsp_ref[0]
    y = _dot(u * vsp, w2_ref[0]) + b2_ref[0]
    x_scr[...] = x + y

    @pl.when(d == pl.num_programs(0) - 1)
    def _final():
        emb = _dot(pool_ref[...], x_scr[...])                # (B, Dm) mean-pool
        out_ref[...] = (_dot(emb, wh_ref[...]) + bh_ref[...]).astype(out_ref.dtype)


# -----------------------------------------------------------------------------
# Parameters (deterministic synthetic init; shapes follow the PyTorch module)
# -----------------------------------------------------------------------------
def init_params(key, c_vocab, c_emb, c_out, seq_len, patch_size,
                d_model, d_ffn, depth):
    ks = jax.random.split(key, 14)
    nrm = lambda k, shp, std=0.1: jax.random.normal(k, shp, jnp.float32) * std
    S = seq_len // patch_size
    return dict(
        cate_emb=nrm(ks[0], (c_vocab, c_emb)),
        w_nume=nrm(ks[1], (c_emb, 10)),                    # Conv1d(10, c_emb, 1)
        w_demo=nrm(ks[2], (c_emb, 4)),                     # Linear(4, c_emb)
        w_patch=nrm(ks[3], (d_model, c_emb, patch_size)),  # patcher Conv1d
        b_patch=nrm(ks[4], (d_model,), 0.02),
        ln1_g=jnp.ones((depth, 1, d_model)),
        ln1_b=jnp.zeros((depth, 1, d_model)),
        # proj1 Linear(d_model, 2*d_ffn) stored as two lane-aligned halves.
        w1_u=nrm(ks[5], (depth, d_model, d_ffn)),
        b1_u=nrm(ks[6], (depth, 1, d_ffn), 0.02),
        w1_v=nrm(ks[7], (depth, d_model, d_ffn)),
        b1_v=nrm(ks[8], (depth, 1, d_ffn), 0.02),
        lns_g=jnp.ones((depth, 1, d_ffn)),
        lns_b=jnp.zeros((depth, 1, d_ffn)),
        w_sp=nrm(ks[9], (depth, S, S), 0.01),              # spatial proj Conv1d
        b_sp=jnp.ones((depth, S, 1)),                      # SGU bias init = 1.0
        w2=nrm(ks[10], (depth, d_ffn, d_model)),
        b2=nrm(ks[11], (depth, 1, d_model), 0.02),
        w_head=nrm(ks[12], (d_model, c_out)),
        b_head=nrm(ks[13], (1, c_out), 0.02),
    )


# -----------------------------------------------------------------------------
# Forward wrapper
# -----------------------------------------------------------------------------
def gmlp_forward(params, cate, nume, demo, patch_size, depth):
    B, _, seq_len = nume.shape
    c_emb = params["w_nume"].shape[0]
    d_model = params["w_patch"].shape[0]
    d_ffn = params["lns_g"].shape[-1]
    c_out = params["w_head"].shape[-1]
    P = patch_size
    S = seq_len // P
    BS = B * S
    PC = c_emb * P

    # ---- input layout plumbing (pure gather/transpose/reshape on tiny inputs) ----
    # TODO(synk): CateEncoder is not defined in the reference source; modeled as
    # a single nn.Embedding(c_vocab, c_emb) lookup (gather stays in plain JAX).
    xcate_p = params["cate_emb"][cate].astype(jnp.float32).reshape(BS, PC)
    nume_p = jnp.transpose(nume, (0, 2, 1)).reshape(BS, P * 10)     # NCL -> patched
    demo_rep = jnp.repeat(demo, S, axis=0)                          # (BS, 4)

    # ---- exact linear weight folding: encoders ∘ patcher (one-time, tiny) ----
    wp2 = jnp.transpose(params["w_patch"], (2, 1, 0)).reshape(PC, d_model)
    wnp = jnp.einsum("ci,mcp->pim", params["w_nume"], params["w_patch"],
                     precision=PRECISION).reshape(P * 10, d_model)
    wdp = jnp.einsum("ci,mcp->im", params["w_demo"], params["w_patch"],
                     precision=PRECISION)                            # (4, Dm)
    bp = params["b_patch"].reshape(1, d_model)

    vmem = pltpu.MemorySpace.VMEM
    x0 = pl.pallas_call(
        stem_patch_kernel,
        out_shape=jax.ShapeDtypeStruct((BS, d_model), jnp.float32),
        in_specs=[pl.BlockSpec(memory_space=vmem)] * 7,
        out_specs=pl.BlockSpec(memory_space=vmem),
    )(xcate_p, nume_p, demo_rep, wp2, wnp, wdp, bp)

    # ---- backbone weight prep (block-diag spatial weight, pooling matrix) ----
    eye_b = jnp.eye(B, dtype=jnp.float32)
    w_sp_bd = (eye_b[None, :, None, :, None] *
               params["w_sp"][:, None, :, None, :]).reshape(depth, BS, BS)
    b_sp_bd = jnp.tile(params["b_sp"], (1, B, 1))                    # (depth, BS, 1)
    pool = jnp.repeat(eye_b, S, axis=1) / float(S)                   # (B, BS)

    F = d_ffn
    grid_spec = pltpu.PrefetchScalarGridSpec(
        num_scalar_prefetch=0,
        grid=(depth,),
        in_specs=[
            pl.BlockSpec((BS, d_model), lambda d: (0, 0)),        # x0 (d==0 only, 8 KiB)
            pl.BlockSpec((1, 1, d_model), lambda d: (d, 0, 0)),   # ln1_g
            pl.BlockSpec((1, 1, d_model), lambda d: (d, 0, 0)),   # ln1_b
            pl.BlockSpec((1, d_model, F), lambda d: (d, 0, 0)),   # w1_u
            pl.BlockSpec((1, 1, F), lambda d: (d, 0, 0)),         # b1_u
            pl.BlockSpec((1, d_model, F), lambda d: (d, 0, 0)),   # w1_v
            pl.BlockSpec((1, 1, F), lambda d: (d, 0, 0)),         # b1_v
            pl.BlockSpec((1, 1, F), lambda d: (d, 0, 0)),         # lns_g
            pl.BlockSpec((1, 1, F), lambda d: (d, 0, 0)),         # lns_b
            pl.BlockSpec((1, BS, BS), lambda d: (d, 0, 0)),       # w_sp (block-diag)
            pl.BlockSpec((1, BS, 1), lambda d: (d, 0, 0)),        # b_sp
            pl.BlockSpec((1, F, d_model), lambda d: (d, 0, 0)),   # w2
            pl.BlockSpec((1, 1, d_model), lambda d: (d, 0, 0)),   # b2
            pl.BlockSpec((B, BS), lambda d: (0, 0)),              # pool
            pl.BlockSpec((d_model, c_out), lambda d: (0, 0)),     # w_head
            pl.BlockSpec((1, c_out), lambda d: (0, 0)),           # b_head
        ],
        out_specs=pl.BlockSpec((B, c_out), lambda d: (0, 0)),
        scratch_shapes=[pltpu.VMEM((BS, d_model), jnp.float32)],
    )
    out = pl.pallas_call(
        gmlp_backbone_kernel,
        out_shape=jax.ShapeDtypeStruct((B, c_out), jnp.float32),
        grid_spec=grid_spec,
        compiler_params=pltpu.CompilerParams(dimension_semantics=("arbitrary",)),
    )(x0,
      params["ln1_g"], params["ln1_b"],
      params["w1_u"], params["b1_u"], params["w1_v"], params["b1_v"],
      params["lns_g"], params["lns_b"], w_sp_bd, b_sp_bd,
      params["w2"], params["b2"], pool, params["w_head"], params["b_head"])
    return out


# -----------------------------------------------------------------------------
# Pure-JAX reference (mirrors the PyTorch forward pass, unfolded weights).
# -----------------------------------------------------------------------------
def reference_forward(params, cate, nume, demo, patch_size, depth):
    pr = PRECISION
    x_cate = jnp.transpose(params["cate_emb"][cate], (0, 2, 1))
    x_nume = jnp.einsum("ci,bit->bct", params["w_nume"], nume, precision=pr)
    x_demo = jnp.einsum("ci,bi->bc", params["w_demo"], demo, precision=pr)[:, :, None]
    h = x_cate + x_nume + x_demo
    B, C, T = h.shape
    S = T // patch_size
    hp = h.reshape(B, C, S, patch_size)
    x = jnp.einsum("bcsk,mck->bsm", hp, params["w_patch"],
                   precision=pr) + params["b_patch"]

    def ln(z, g, b):
        mu = z.mean(-1, keepdims=True)
        var = ((z - mu) ** 2).mean(-1, keepdims=True)
        return (z - mu) / jnp.sqrt(var + LN_EPS) * g + b

    for d in range(depth):
        res = x
        xn = ln(x, params["ln1_g"][d], params["ln1_b"][d])
        u = jax.nn.gelu(jnp.einsum("bsm,mf->bsf", xn, params["w1_u"][d],
                                   precision=pr) + params["b1_u"][d],
                        approximate=False)
        v = jax.nn.gelu(jnp.einsum("bsm,mf->bsf", xn, params["w1_v"][d],
                                   precision=pr) + params["b1_v"][d],
                        approximate=False)
        vn = ln(v, params["lns_g"][d], params["lns_b"][d])
        vsp = jnp.einsum("ij,bjf->bif", params["w_sp"][d], vn,
                         precision=pr) + params["b_sp"][d]
        x = jnp.einsum("bsf,fm->bsm", u * vsp, params["w2"][d],
                       precision=pr) + params["b2"][d] + res
    emb = x.mean(axis=1)
    return jnp.dot(emb, params["w_head"], precision=pr) + params["b_head"]


if __name__ == "__main__":
    B = 2
    C_VOCAB = 12
    C_EMB = 8
    C_OUT = 4
    SEQ_LEN = 16
    PATCH = 2
    D_MODEL = 128      # lane-aligned feature dims (multiple of 128)
    D_FFN = 128
    DEPTH = 2

    key = jax.random.PRNGKey(0)
    kp, kc, kn, kd = jax.random.split(key, 4)
    params = init_params(kp, C_VOCAB, C_EMB, C_OUT, SEQ_LEN, PATCH,
                         D_MODEL, D_FFN, DEPTH)
    cate = jax.random.randint(kc, (B, SEQ_LEN), 0, C_VOCAB)          # int ids
    nume = jax.random.normal(kn, (B, 10, SEQ_LEN), jnp.float32)      # NCL
    demo = jax.random.normal(kd, (B, 4), jnp.float32)

    out = gmlp_forward(params, cate, nume, demo, PATCH, DEPTH)
    out = jax.block_until_ready(out)
    assert out.shape == (B, C_OUT)

    ref = reference_forward(params, cate, nume, demo, PATCH, DEPTH)
    np.testing.assert_allclose(np.asarray(out), np.asarray(ref),
                               rtol=1e-4, atol=1e-4)
    print("KERNEL_OK")
</pallas_src>

<mosaic_0001>
module attributes {stable_mosaic.version = 11 : i64} {
  func.func @stem_patch_kernel(%arg0: memref<16x16xf32, #tpu.memory_space<vmem>>, %arg1: memref<16x20xf32, #tpu.memory_space<vmem>>, %arg2: memref<16x4xf32, #tpu.memory_space<vmem>>, %arg3: memref<16x128xf32, #tpu.memory_space<vmem>>, %arg4: memref<20x128xf32, #tpu.memory_space<vmem>>, %arg5: memref<4x128xf32, #tpu.memory_space<vmem>>, %arg6: memref<1x128xf32, #tpu.memory_space<vmem>>, %arg7: memref<16x128xf32, #tpu.memory_space<vmem>>) attributes {dimension_semantics = [], scalar_prefetch = 0 : i64, scratch_operands = 0 : i64, tpu.core_type = #tpu.core_type<tc>} {
    %c0 = arith.constant 0 : index
    %c0_0 = arith.constant 0 : index
    %0 = vector.load %arg0[%c0, %c0_0] : memref<16x16xf32, #tpu.memory_space<vmem>>, vector<16x16xf32>
    %c0_1 = arith.constant 0 : index
    %c0_2 = arith.constant 0 : index
    %1 = vector.load %arg3[%c0_1, %c0_2] : memref<16x128xf32, #tpu.memory_space<vmem>>, vector<16x128xf32>
    %cst = arith.constant dense<0.000000e+00> : vector<16x128xf32>
    %2 = tpu.matmul %0, %1, %cst {dimension_numbers = #tpu.dot_dimension_numbers<[1], [0], [0], [1], [0, 0, 1, 1], [], []>, precision = #tpu.contract_precision<fp32>} : vector<16x16xf32>, vector<16x128xf32>, vector<16x128xf32> -> vector<16x128xf32>
    %c0_3 = arith.constant 0 : index
    %c0_4 = arith.constant 0 : index
    %3 = vector.load %arg1[%c0_3, %c0_4] : memref<16x20xf32, #tpu.memory_space<vmem>>, vector<16x20xf32>
    %c0_5 = arith.constant 0 : index
    %c0_6 = arith.constant 0 : index
    %4 = vector.load %arg4[%c0_5, %c0_6] : memref<20x128xf32, #tpu.memory_space<vmem>>, vector<20x128xf32>
    %cst_7 = arith.constant dense<0.000000e+00> : vector<16x128xf32>
    %5 = tpu.matmul %3, %4, %cst_7 {dimension_numbers = #tpu.dot_dimension_numbers<[1], [0], [0], [1], [0, 0, 1, 1], [], []>, precision = #tpu.contract_precision<fp32>} : vector<16x20xf32>, vector<20x128xf32>, vector<16x128xf32> -> vector<16x128xf32>
    %6 = arith.addf %2, %5 : vector<16x128xf32>
    %c0_8 = arith.constant 0 : index
    %c0_9 = arith.constant 0 : index
    %7 = vector.load %arg2[%c0_8, %c0_9] : memref<16x4xf32, #tpu.memory_space<vmem>>, vector<16x4xf32>
    %c0_10 = arith.constant 0 : index
    %c0_11 = arith.constant 0 : index
    %8 = vector.load %arg5[%c0_10, %c0_11] : memref<4x128xf32, #tpu.memory_space<vmem>>, vector<4x128xf32>
    %cst_12 = arith.constant dense<0.000000e+00> : vector<16x128xf32>
    %9 = tpu.matmul %7, %8, %cst_12 {dimension_numbers = #tpu.dot_dimension_numbers<[1], [0], [0], [1], [0, 0, 1, 1], [], []>, precision = #tpu.contract_precision<fp32>} : vector<16x4xf32>, vector<4x128xf32>, vector<16x128xf32> -> vector<16x128xf32>
    %10 = arith.addf %6, %9 : vector<16x128xf32>
    %c0_13 = arith.constant 0 : index
    %c0_14 = arith.constant 0 : index
    %11 = vector.load %arg6[%c0_13, %c0_14] : memref<1x128xf32, #tpu.memory_space<vmem>>, vector<1x128xf32>
    %12 = vector.broadcast %11 : vector<1x128xf32> to vector<16x128xf32>
    %13 = arith.addf %10, %12 : vector<16x128xf32>
    %c0_15 = arith.constant 0 : index
    %c0_16 = arith.constant 0 : index
    %14 = vector.load %arg7[%c0_15, %c0_16] : memref<16x128xf32, #tpu.memory_space<vmem>>, vector<16x128xf32>
    tpu.vector_store %arg7[%c0_15, %c0_16], %13 {strides = array<i32>} : memref<16x128xf32, #tpu.memory_space<vmem>>, vector<16x128xf32>,
    return
  }
}

</mosaic_0001>

<llo_original>
// kernel: tpu_custom_call.1
$region0: #{tpu_custom_call.1}
  #allocation0 [shape = 'u32[]', space=smem, size = 0x4, offset = 0x4, fixed_abs, tag = 'smem constant byte address 0x4 - core index']
  #allocation1 [shape = 'u32[144,128]{1,0:T(1,128)}', space=vmem, size = 0x12000, scoped, tag = 'internal scratch']
  %s0 = inlined_call_operand.hbm [shape: f32[16,16], index: 0, kind: input, shape index: {}]
  %s1 = inlined_call_operand.hbm [shape: f32[16,20], index: 1, kind: input, shape index: {}]
  %s2 = inlined_call_operand.vmem [shape: f32[16,4], index: 2, kind: input, shape index: {}]
  %s3 = inlined_call_operand.hbm [shape: f32[16,128], index: 3, kind: input, shape index: {}]
  %s4 = inlined_call_operand.vmem [shape: f32[20,128], index: 4, kind: input, shape index: {}]
  %s5 = inlined_call_operand.vmem [shape: f32[4,128], index: 5, kind: input, shape index: {}]
  %s6 = inlined_call_operand.vmem [shape: f32[1,128], index: 6, kind: input, shape index: {}]
  %s7 = inlined_call_operand.hbm [shape: f32[16,128], index: 7, kind: output, shape index: {}]
  %s8 = sld [smem:[#allocation0]]
  $region50: #{tpu_custom_call.1} parent=0
    _
  %s10 = ssub.s32 1, %s8
  %s11 = scalar_select 0, %s10, %s8
  $region1: #{tpu_custom_call.1} parent=0
    #allocation2 [shape = 'u8[8192]{0}', space=vmem, size = 0x2000, scoped, tag = 'input window, operand 0, single buffered']
    #allocation3 [shape = 's32[1]{0}', space=sflag, size = 0x4, scoped, tag = 'scoped memory for tpu_custom_call.1']
    #allocation4 [shape = 's32[1]{0}', space=sflag, size = 0x4, scoped, tag = 'scoped memory for tpu_custom_call.1']
    #allocation5 [shape = 'u8[8192]{0}', space=vmem, size = 0x2000, scoped, tag = 'input window, operand 1, single buffered']
    #allocation6 [shape = 's32[1]{0}', space=sflag, size = 0x4, scoped, tag = 'scoped memory for tpu_custom_call.1']
    #allocation7 [shape = 'u8[8192]{0}', space=vmem, size = 0x2000, scoped, tag = 'input window, operand 3, single buffered']
    #allocation8 [shape = 'u8[8192]{0}', space=vmem, size = 0x2000, scoped, tag = 'output window, operand 0, single buffered']
    %12 = vsyncpa [#allocation3], 0
    %13 = vsyncpa [#allocation6], 0
    %14 = vsyncpa [#allocation4], 0
    // Predicated region
    $region2: #{tpu_custom_call.1} parent=1 // pred_check
      _
    $region3: #{tpu_custom_call.1} parent=1 // pred_check_branch
      %16 = sbr.rel (0) target = $region5
    $region4: #{tpu_custom_call.1} parent=1 // pred_region
      %s18 = ssub.s32 256, 256
      %19 = vsyncadd [#allocation3], %s18
      %s20 = sshll.u32 [#allocation2], 4
      %s21 = int_to_ptr.vmem [resolvable:$true] %s20
      %26 = dma.hbm_to_vmem [thread:$0]  %s0, 256, %s21, [#allocation3], 128, 128, 8
    $region5: #{tpu_custom_call.1} parent=1 // pred_fallthru
      _
    // Predicated region
    $region6: #{tpu_custom_call.1} parent=1 // pred_check
      _
    $region7: #{tpu_custom_call.1} parent=1 // pred_check_branch
      %28 = sbr.rel (0) target = $region9
    $region8: #{tpu_custom_call.1} parent=1 // pred_region
      %s30 = ssub.s32 256, 256
      %31 = vsyncadd [#allocation6], %s30
      %s32 = sshll.u32 [#allocation5], 4
      %s33 = int_to_ptr.vmem [resolvable:$true] %s32
      %38 = dma.hbm_to_vmem [thread:$0]  %s1, 256, %s33, [#allocation6], 128, 128, 8
    $region9: #{tpu_custom_call.1} parent=1 // pred_fallthru
      _
    // Predicated region
    $region10: #{tpu_custom_call.1} parent=1 // pred_check
      _
    $region11: #{tpu_custom_call.1} parent=1 // pred_check_branch
      %40 = sbr.rel (0) target = $region13
    $region12: #{tpu_custom_call.1} parent=1 // pred_region
      _
    $region13: #{tpu_custom_call.1} parent=1 // pred_fallthru
      _
    // Predicated region
    $region14: #{tpu_custom_call.1} parent=1 // pred_check
      _
    $region15: #{tpu_custom_call.1} parent=1 // pred_check_branch
      %42 = sbr.rel (0) target = $region17
    $region16: #{tpu_custom_call.1} parent=1 // pred_region
      %s44 = ssub.s32 256, 256
      %45 = vsyncadd [#allocation6], %s44
      %s46 = sshll.u32 [#allocation7], 4
      %s47 = int_to_ptr.vmem [resolvable:$true] %s46
      %52 = dma.hbm_to_vmem [thread:$0]  %s3, 256, %s47, [#allocation6], 128, 128, 8
    $region17: #{tpu_custom_call.1} parent=1 // pred_fallthru
      _
    // Predicated region
    $region18: #{tpu_custom_call.1} parent=1 // pred_check
      _
    $region19: #{tpu_custom_call.1} parent=1 // pred_check_branch
      %54 = sbr.rel (0) target = $region21
    $region20: #{tpu_custom_call.1} parent=1 // pred_region
      _
    $region21: #{tpu_custom_call.1} parent=1 // pred_fallthru
      _
    // Predicated region
    $region22: #{tpu_custom_call.1} parent=1 // pred_check
      _
    $region23: #{tpu_custom_call.1} parent=1 // pred_check_branch
      %56 = sbr.rel (0) target = $region25
    $region24: #{tpu_custom_call.1} parent=1 // pred_region
      _
    $region25: #{tpu_custom_call.1} parent=1 // pred_fallthru
      _
    // Predicated region
    $region26: #{tpu_custom_call.1} parent=1 // pred_check
      _
    $region27: #{tpu_custom_call.1} parent=1 // pred_check_branch
      %58 = sbr.rel (0) target = $region29
    $region28: #{tpu_custom_call.1} parent=1 // pred_region
      _
    $region29: #{tpu_custom_call.1} parent=1 // pred_fallthru
      _
    // Predicated region
    $region30: #{tpu_custom_call.1} parent=1 // pred_check
      _
    $region31: #{tpu_custom_call.1} parent=1 // pred_check_branch
      %60 = sbr.rel (0) target = $region33
    $region32: #{tpu_custom_call.1} parent=1 // pred_region
      %61 = dma.done [#allocation3], 256
    $region33: #{tpu_custom_call.1} parent=1 // pred_fallthru
      _
    // Predicated region
    $region34: #{tpu_custom_call.1} parent=1 // pred_check
      _
    $region35: #{tpu_custom_call.1} parent=1 // pred_check_branch
      %63 = sbr.rel (0) target = $region37
    $region36: #{tpu_custom_call.1} parent=1 // pred_region
      %64 = dma.done [#allocation6], 256
    $region37: #{tpu_custom_call.1} parent=1 // pred_fallthru
      _
    // Predicated region
    $region38: #{tpu_custom_call.1} parent=1 // pred_check
      _
    $region39: #{tpu_custom_call.1} parent=1 // pred_check_branch
      %66 = sbr.rel (0) target = $region41
    $region40: #{tpu_custom_call.1} parent=1 // pred_region
      %67 = dma.done [#allocation6], 256
    $region41: #{tpu_custom_call.1} parent=1 // pred_fallthru
      _
    %v68 = vld [vmem:[#allocation2] sm:$0xff]
    %v69 = vld [vmem:[#allocation2 + $0x8] sm:$0xff]
    %v70 = vld [vmem:[#allocation7] sm:$0xff]
    %v71 = vld [vmem:[#allocation7 + $0x8] sm:$0xff]
    %v72 = vld [vmem:[#allocation5] sm:$0xff]
    %v73 = vld [vmem:[#allocation5 + $0x8] sm:$0xff]
    %v74 = vld [vmem:[%s4] sm:$0xff]
    %v75 = vld [vmem:[%s4 + $0x8] sm:$0xff]
    %v76 = vld [vmem:[%s4 + $0x10] sm:$0xf]
    %vm77 = vcmask 162816
    %v79 = vsel %vm77, %v72, 0
    %v82 = vsel %vm77, %v73, 0
    %vm84 = vcmask 1043456
    %v86 = vsel %vm84, %v76, 0
    %88 = vmatprep.subr.mxu0 0.0
    %89 = vmatpush1.msra.mxu0 0.0
    %90 = vmatprep.subr.mxu0 0.0
    %91 = vmatpush1.msra.mxu0 0.0
    %92 = vmatprep.subr.mxu0 0.0
    %93 = vmatpush1.msra.mxu0 0.0
    %94 = vmatprep.subr.mxu0 0.0
    %95 = vmatpush1.msra.mxu0 0.0
    %96 = vmatprep.subr.mxu0 0.0
    %97 = vmatpush1.msra.mxu0 0.0
    %98 = vmatprep.subr.mxu0 0.0
    %99 = vmatpush1.msra.mxu0 0.0
    %100 = vmatprep.subr.mxu0 0.0
    %101 = vmatpush1.msra.mxu0 0.0
    %102 = vmatprep.subr.mxu0 0.0
    %103 = vmatpush1.msra.mxu0 0.0
    %104 = vmatprep.subr.mxu0 0.0
    %105 = vmatpush1.msra.mxu0 0.0
    %106 = vmatprep.subr.mxu0 0.0
    %107 = vmatpush1.msra.mxu0 0.0
    %108 = vmatprep.subr.mxu0 0.0
    %109 = vmatpush1.msra.mxu0 0.0
    %110 = vmatprep.subr.mxu0 0.0
    %111 = vmatpush1.msra.mxu0 0.0
    %112 = vmatprep.subr.mxu0 0.0
    %113 = vmatpush1.msra.mxu0 0.0
    %114 = vmatprep.subr.mxu0 0.0
    %v115 = vand.u32 %v86, 4294901760
    %116 = vmatpush1.msra.mxu0 %v115
    %117 = vmatprep.subr.mxu0 0.0
    %v118 = vand.u32 %v75, 4294901760
    %119 = vmatpush1.msra.mxu0 %v118
    %120 = vmatprep.subr.mxu0 0.0
    %v121 = vand.u32 %v74, 4294901760
    %122 = vmatpush1.msra.mxu0 %v121
    %123 = vmatprep.subr.mxu0 0.0
    %124 = vmatpush2.msra.mxu0 0.0
    %125 = vmatprep.subr.mxu0 0.0
    %126 = vmatpush2.msra.mxu0 0.0
    %127 = vmatprep.subr.mxu0 0.0
    %128 = vmatpush2.msra.mxu0 0.0
    %129 = vmatprep.subr.mxu0 0.0
    %130 = vmatpush2.msra.mxu0 0.0
    %131 = vmatprep.subr.mxu0 0.0
    %132 = vmatpush2.msra.mxu0 0.0
    %133 = vmatprep.subr.mxu0 0.0
    %134 = vmatpush2.msra.mxu0 0.0
    %135 = vmatprep.subr.mxu0 0.0
    %136 = vmatpush2.msra.mxu0 0.0
    %137 = vmatprep.subr.mxu0 0.0
    %138 = vmatpush2.msra.mxu0 0.0
    %139 = vmatprep.subr.mxu0 0.0
    %140 = vmatpush2.msra.mxu0 0.0
    %141 = vmatprep.subr.mxu0 0.0
    %142 = vmatpush2.msra.mxu0 0.0
    %143 = vmatprep.subr.mxu0 0.0
    %144 = vmatpush2.msra.mxu0 0.0
    %145 = vmatprep.subr.mxu0 0.0
    %146 = vmatpush2.msra.mxu0 0.0
    %147 = vmatprep.subr.mxu0 0.0
    %148 = vmatpush2.msra.mxu0 0.0
    %149 = vmatprep.subr.mxu0 0.0
    %150 = vmatpush2.msra.mxu0 0.0
    %151 = vmatprep.subr.mxu0 0.0
    %152 = vmatpush2.msra.mxu0 0.0
    %153 = vmatprep.subr.mxu0 0.0
    %154 = vmatpush2.msra.mxu0 0.0
    %155 = vmatprep.mubr.f32.mxu0 0.0
    %v156 = vand.u32 %v79, 4294901760
    %v157 = vsub.f32 %v79, %v156
    %v158 = vand.u32 %v157, 4294901760
    %v159 = vsub.f32 %v157, %v158
    %v160 = vand.u32 %v159, 4294901760
    %161 = vmatmul.mubr.f32.gmra.mxu0 %v160
    %v162 = vpop.f32.mrf.mxu0
    %v163 = vadd.f32 0.0, %v162
    %v164 = vpop.f32.mrf.mxu0
    %165 = vmatprep.mubr.f32.mxu0 0.0
    %v166 = vand.u32 %v82, 4294901760
    %v167 = vsub.f32 %v82, %v166
    %v168 = vand.u32 %v167, 4294901760
    %v169 = vsub.f32 %v167, %v168
    %v170 = vand.u32 %v169, 4294901760
    %171 = vmatmul.mubr.f32.gmra.mxu0 %v170
    %v172 = vpop.f32.mrf.mxu0
    %v173 = vadd.f32 0.0, %v172
    %v174 = vpop.f32.mrf.mxu0
    %175 = vdwg.mxu0
    %176 = vmatprep.subr.mxu0 0.0
    %177 = vmatpush1.msra.mxu0 0.0
    %178 = vmatprep.subr.mxu0 0.0
    %179 = vmatpush1.msra.mxu0 0.0
    %180 = vmatprep.subr.mxu0 0.0
    %181 = vmatpush1.msra.mxu0 0.0
    %182 = vmatprep.subr.mxu0 0.0
    %183 = vmatpush1.msra.mxu0 0.0
    %184 = vmatprep.subr.mxu0 0.0
    %185 = vmatpush1.msra.mxu0 0.0
    %186 = vmatprep.subr.mxu0 0.0
    %187 = vmatpush1.msra.mxu0 0.0
    %188 = vmatprep.subr.mxu0 0.0
    %189 = vmatpush1.msra.mxu0 0.0
    %190 = vmatprep.subr.mxu0 0.0
    %191 = vmatpush1.msra.mxu0 0.0
    %192 = vmatprep.subr.mxu0 0.0
    %193 = vmatpush1.msra.mxu0 0.0
    %194 = vmatprep.subr.mxu0 0.0
    %195 = vmatpush1.msra.mxu0 0.0
    %196 = vmatprep.subr.mxu0 0.0
    %197 = vmatpush1.msra.mxu0 0.0
    %198 = vmatprep.subr.mxu0 0.0
    %199 = vmatpush1.msra.mxu0 0.0
    %200 = vmatprep.subr.mxu0 0.0
    %201 = vmatpush1.msra.mxu0 0.0
    %202 = vmatprep.subr.mxu0 0.0
    %v203 = vand.u32 %v86, 4294901760
    %v204 = vsub.f32 %v86, %v203
    %v205 = vand.u32 %v204, 4294901760
    %v206 = vsub.f32 %v204, %v205
    %v207 = vand.u32 %v206, 4294901760
    %208 = vmatpush1.msra.mxu0 %v207
    %209 = vmatprep.subr.mxu0 0.0
    %v210 = vand.u32 %v75, 4294901760
    %v211 = vsub.f32 %v75, %v210
    %v212 = vand.u32 %v211, 4294901760
    %v213 = vsub.f32 %v211, %v212
    %v214 = vand.u32 %v213, 4294901760
    %215 = vmatpush1.msra.mxu0 %v214
    %216 = vmatprep.subr.mxu0 0.0
    %v217 = vand.u32 %v74, 4294901760
    %v218 = vsub.f32 %v74, %v217
    %v219 = vand.u32 %v218, 4294901760
    %v220 = vsub.f32 %v218, %v219
    %v221 = vand.u32 %v220, 4294901760
    %222 = vmatpush1.msra.mxu0 %v221
    %223 = vmatprep.subr.mxu0 0.0
    %224 = vmatpush2.msra.mxu0 0.0
    %225 = vmatprep.subr.mxu0 0.0
    %226 = vmatpush2.msra.mxu0 0.0
    %227 = vmatprep.subr.mxu0 0.0
    %228 = vmatpush2.msra.mxu0 0.0
    %229 = vmatprep.subr.mxu0 0.0
    %230 = vmatpush2.msra.mxu0 0.0
    %231 = vmatprep.subr.mxu0 0.0
    %232 = vmatpush2.msra.mxu0 0.0
    %233 = vmatprep.subr.mxu0 0.0
    %234 = vmatpush2.msra.mxu0 0.0
    %235 = vmatprep.subr.mxu0 0.0
    %236 = vmatpush2.msra.mxu0 0.0
    %237 = vmatprep.subr.mxu0 0.0
    %238 = vmatpush2.msra.mxu0 0.0
    %239 = vmatprep.subr.mxu0 0.0
    %240 = vmatpush2.msra.mxu0 0.0
    %241 = vmatprep.subr.mxu0 0.0
    %242 = vmatpush2.msra.mxu0 0.0
    %243 = vmatprep.subr.mxu0 0.0
    %244 = vmatpush2.msra.mxu0 0.0
    %245 = vmatprep.subr.mxu0 0.0
    %246 = vmatpush2.msra.mxu0 0.0
    %247 = vmatprep.subr.mxu0 0.0
    %248 = vmatpush2.msra.mxu0 0.0
    %249 = vmatprep.subr.mxu0 0.0
    %250 = vmatpush2.msra.mxu0 0.0
    %251 = vmatprep.subr.mxu0 0.0
    %252 = vmatpush2.msra.mxu0 0.0
    %253 = vmatprep.subr.mxu0 0.0
    %254 = vmatpush2.msra.mxu0 0.0
    %255 = vmatprep.mubr.f32.mxu0 0.0
    %v256 = vand.u32 %v79, 4294901760
    %257 = vmatmul.mubr.f32.gmra.mxu0 %v256
    %v258 = vpop.f32.mrf.mxu0
    %v259 = vadd.f32 %v163, %v258
    %v260 = vpop.f32.mrf.mxu0
    %261 = vmatprep.mubr.f32.mxu0 0.0
    %v262 = vand.u32 %v82, 4294901760
    %263 = vmatmul.mubr.f32.gmra.mxu0 %v262
    %v264 = vpop.f32.mrf.mxu0
    %v265 = vadd.f32 %v173, %v264
    %v266 = vpop.f32.mrf.mxu0
    %267 = vdwg.mxu0
    %268 = vmatprep.subr.mxu0 0.0
    %269 = vmatpush1.msra.mxu0 0.0
    %270 = vmatprep.subr.mxu0 0.0
    %271 = vmatpush1.msra.mxu0 0.0
    %272 = vmatprep.subr.mxu0 0.0
    %273 = vmatpush1.msra.mxu0 0.0
    %274 = vmatprep.subr.mxu0 0.0
    %275 = vmatpush1.msra.mxu0 0.0
    %276 = vmatprep.subr.mxu0 0.0
    %277 = vmatpush1.msra.mxu0 0.0
    %278 = vmatprep.subr.mxu0 0.0
    %279 = vmatpush1.msra.mxu0 0.0
    %280 = vmatprep.subr.mxu0 0.0
    %281 = vmatpush1.msra.mxu0 0.0
    %282 = vmatprep.subr.mxu0 0.0
    %283 = vmatpush1.msra.mxu0 0.0
    %284 = vmatprep.subr.mxu0 0.0
    %285 = vmatpush1.msra.mxu0 0.0
    %286 = vmatprep.subr.mxu0 0.0
    %287 = vmatpush1.msra.mxu0 0.0
    %288 = vmatprep.subr.mxu0 0.0
    %289 = vmatpush1.msra.mxu0 0.0
    %290 = vmatprep.subr.mxu0 0.0
    %291 = vmatpush1.msra.mxu0 0.0
    %292 = vmatprep.subr.mxu0 0.0
    %293 = vmatpush1.msra.mxu0 0.0
    %294 = vmatprep.subr.mxu0 0.0
    %v295 = vand.u32 %v86, 4294901760
    %v296 = vsub.f32 %v86, %v295
    %297 = vmatpush1.msra.mxu0 %v296
    %298 = vmatprep.subr.mxu0 0.0
    %v299 = vand.u32 %v75, 4294901760
    %v300 = vsub.f32 %v75, %v299
    %301 = vmatpush1.msra.mxu0 %v300
    %302 = vmatprep.subr.mxu0 0.0
    %v303 = vand.u32 %v74, 4294901760
    %v304 = vsub.f32 %v74, %v303
    %305 = vmatpush1.msra.mxu0 %v304
    %306 = vmatprep.subr.mxu0 0.0
    %307 = vmatpush2.msra.mxu0 0.0
    %308 = vmatprep.subr.mxu0 0.0
    %309 = vmatpush2.msra.mxu0 0.0
    %310 = vmatprep.subr.mxu0 0.0
    %311 = vmatpush2.msra.mxu0 0.0
    %312 = vmatprep.subr.mxu0 0.0
    %313 = vmatpush2.msra.mxu0 0.0
    %314 = vmatprep.subr.mxu0 0.0
    %315 = vmatpush2.msra.mxu0 0.0
    %316 = vmatprep.subr.mxu0 0.0
    %317 = vmatpush2.msra.mxu0 0.0
    %318 = vmatprep.subr.mxu0 0.0
    %319 = vmatpush2.msra.mxu0 0.0
    %320 = vmatprep.subr.mxu0 0.0
    %321 = vmatpush2.msra.mxu0 0.0
    %322 = vmatprep.subr.mxu0 0.0
    %323 = vmatpush2.msra.mxu0 0.0
    %324 = vmatprep.subr.mxu0 0.0
    %325 = vmatpush2.msra.mxu0 0.0
    %326 = vmatprep.subr.mxu0 0.0
    %327 = vmatpush2.msra.mxu0 0.0
    %328 = vmatprep.subr.mxu0 0.0
    %329 = vmatpush2.msra.mxu0 0.0
    %330 = vmatprep.subr.mxu0 0.0
    %331 = vmatpush2.msra.mxu0 0.0
    %332 = vmatprep.subr.mxu0 0.0
    %333 = vmatpush2.msra.mxu0 0.0
    %334 = vmatprep.subr.mxu0 0.0
    %335 = vmatpush2.msra.mxu0 0.0
    %336 = vmatprep.subr.mxu0 0.0
    %337 = vmatpush2.msra.mxu0 0.0
    %338 = vmatprep.mubr.f32.mxu0 0.0
    %v339 = vand.u32 %v79, 4294901760
    %v340 = vsub.f32 %v79, %v339
    %341 = vmatmul.mubr.f32.gmra.mxu0 %v340
    %v342 = vpop.f32.mrf.mxu0
    %v343 = vadd.f32 %v259, %v342
    %v344 = vpop.f32.mrf.mxu0
    %345 = vmatprep.mubr.f32.mxu0 0.0
    %v346 = vand.u32 %v82, 4294901760
    %v347 = vsub.f32 %v82, %v346
    %348 = vmatmul.mubr.f32.gmra.mxu0 %v347
    %v349 = vpop.f32.mrf.mxu0
    %v350 = vadd.f32 %v265, %v349
    %v351 = vpop.f32.mrf.mxu0
    %352 = vdwg.mxu0
    %353 = vmatprep.subr.mxu0 0.0
    %354 = vmatpush1.msra.mxu0 0.0
    %355 = vmatprep.subr.mxu0 0.0
    %356 = vmatpush1.msra.mxu0 0.0
    %357 = vmatprep.subr.mxu0 0.0
    %358 = vmatpush1.msra.mxu0 0.0
    %359 = vmatprep.subr.mxu0 0.0
    %360 = vmatpush1.msra.mxu0 0.0
    %361 = vmatprep.subr.mxu0 0.0
    %362 = vmatpush1.msra.mxu0 0.0
    %363 = vmatprep.subr.mxu0 0.0
    %364 = vmatpush1.msra.mxu0 0.0
    %365 = vmatprep.subr.mxu0 0.0
    %366 = vmatpush1.msra.mxu0 0.0
    %367 = vmatprep.subr.mxu0 0.0
    %368 = vmatpush1.msra.mxu0 0.0
    %369 = vmatprep.subr.mxu0 0.0
    %370 = vmatpush1.msra.mxu0 0.0
    %371 = vmatprep.subr.mxu0 0.0
    %372 = vmatpush1.msra.mxu0 0.0
    %373 = vmatprep.subr.mxu0 0.0
    %374 = vmatpush1.msra.mxu0 0.0
    %375 = vmatprep.subr.mxu0 0.0
    %376 = vmatpush1.msra.mxu0 0.0
    %377 = vmatprep.subr.mxu0 0.0
    %378 = vmatpush1.msra.mxu0 0.0
    %379 = vmatprep.subr.mxu0 0.0
    %v380 = vand.u32 %v86, 4294901760
    %381 = vmatpush1.msra.mxu0 %v380
    %382 = vmatprep.subr.mxu0 0.0
    %v383 = vand.u32 %v75, 4294901760
    %384 = vmatpush1.msra.mxu0 %v383
    %385 = vmatprep.subr.mxu0 0.0
    %v386 = vand.u32 %v74, 4294901760
    %387 = vmatpush1.msra.mxu0 %v386
    %388 = vmatprep.subr.mxu0 0.0
    %389 = vmatpush2.msra.mxu0 0.0
    %390 = vmatprep.subr.mxu0 0.0
    %391 = vmatpush2.msra.mxu0 0.0
    %392 = vmatprep.subr.mxu0 0.0
    %393 = vmatpush2.msra.mxu0 0.0
    %394 = vmatprep.subr.mxu0 0.0
    %395 = vmatpush2.msra.mxu0 0.0
    %396 = vmatprep.subr.mxu0 0.0
    %397 = vmatpush2.msra.mxu0 0.0
    %398 = vmatprep.subr.mxu0 0.0
    %399 = vmatpush2.msra.mxu0 0.0
    %400 = vmatprep.subr.mxu0 0.0
    %401 = vmatpush2.msra.mxu0 0.0
    %402 = vmatprep.subr.mxu0 0.0
    %403 = vmatpush2.msra.mxu0 0.0
    %404 = vmatprep.subr.mxu0 0.0
    %405 = vmatpush2.msra.mxu0 0.0
    %406 = vmatprep.subr.mxu0 0.0
    %407 = vmatpush2.msra.mxu0 0.0
    %408 = vmatprep.subr.mxu0 0.0
    %409 = vmatpush2.msra.mxu0 0.0
    %410 = vmatprep.subr.mxu0 0.0
    %411 = vmatpush2.msra.mxu0 0.0
    %412 = vmatprep.subr.mxu0 0.0
    %413 = vmatpush2.msra.mxu0 0.0
    %414 = vmatprep.subr.mxu0 0.0
    %415 = vmatpush2.msra.mxu0 0.0
    %416 = vmatprep.subr.mxu0 0.0
    %417 = vmatpush2.msra.mxu0 0.0
    %418 = vmatprep.subr.mxu0 0.0
    %419 = vmatpush2.msra.mxu0 0.0
    %420 = vmatprep.mubr.f32.mxu0 0.0
    %v421 = vand.u32 %v79, 4294901760
    %v422 = vsub.f32 %v79, %v421
    %v423 = vand.u32 %v422, 4294901760
    %424 = vmatmul.mubr.f32.gmra.mxu0 %v423
    %v425 = vpop.f32.mrf.mxu0
    %v426 = vadd.f32 %v343, %v425
    %v427 = vpop.f32.mrf.mxu0
    %428 = vmatprep.mubr.f32.mxu0 0.0
    %v429 = vand.u32 %v82, 4294901760
    %v430 = vsub.f32 %v82, %v429
    %v431 = vand.u32 %v430, 4294901760
    %432 = vmatmul.mubr.f32.gmra.mxu0 %v431
    %v433 = vpop.f32.mrf.mxu0
    %v434 = vadd.f32 %v350, %v433
    %v435 = vpop.f32.mrf.mxu0
    %436 = vdwg.mxu0
    %437 = vmatprep.subr.mxu0 0.0
    %438 = vmatpush1.msra.mxu0 0.0
    %439 = vmatprep.subr.mxu0 0.0
    %440 = vmatpush1.msra.mxu0 0.0
    %441 = vmatprep.subr.mxu0 0.0
    %442 = vmatpush1.msra.mxu0 0.0
    %443 = vmatprep.subr.mxu0 0.0
    %444 = vmatpush1.msra.mxu0 0.0
    %445 = vmatprep.subr.mxu0 0.0
    %446 = vmatpush1.msra.mxu0 0.0
    %447 = vmatprep.subr.mxu0 0.0
    %448 = vmatpush1.msra.mxu0 0.0
    %449 = vmatprep.subr.mxu0 0.0
    %450 = vmatpush1.msra.mxu0 0.0
    %451 = vmatprep.subr.mxu0 0.0
    %452 = vmatpush1.msra.mxu0 0.0
    %453 = vmatprep.subr.mxu0 0.0
    %454 = vmatpush1.msra.mxu0 0.0
    %455 = vmatprep.subr.mxu0 0.0
    %456 = vmatpush1.msra.mxu0 0.0
    %457 = vmatprep.subr.mxu0 0.0
    %458 = vmatpush1.msra.mxu0 0.0
    %459 = vmatprep.subr.mxu0 0.0
    %460 = vmatpush1.msra.mxu0 0.0
    %461 = vmatprep.subr.mxu0 0.0
    %462 = vmatpush1.msra.mxu0 0.0
    %463 = vmatprep.subr.mxu0 0.0
    %v464 = vand.u32 %v86, 4294901760
    %v465 = vsub.f32 %v86, %v464
    %v466 = vand.u32 %v465, 4294901760
    %467 = vmatpush1.msra.mxu0 %v466
    %468 = vmatprep.subr.mxu0 0.0
    %v469 = vand.u32 %v75, 4294901760
    %v470 = vsub.f32 %v75, %v469
    %v471 = vand.u32 %v470, 4294901760
    %472 = vmatpush1.msra.mxu0 %v471
    %473 = vmatprep.subr.mxu0 0.0
    %v474 = vand.u32 %v74, 4294901760
    %v475 = vsub.f32 %v74, %v474
    %v476 = vand.u32 %v475, 4294901760
    %477 = vmatpush1.msra.mxu0 %v476
    %478 = vmatprep.subr.mxu0 0.0
    %479 = vmatpush2.msra.mxu0 0.0
    %480 = vmatprep.subr.mxu0 0.0
    %481 = vmatpush2.msra.mxu0 0.0
    %482 = vmatprep.subr.mxu0 0.0
    %483 = vmatpush2.msra.mxu0 0.0
    %484 = vmatprep.subr.mxu0 0.0
    %485 = vmatpush2.msra.mxu0 0.0
    %486 = vmatprep.subr.mxu0 0.0
    %487 = vmatpush2.msra.mxu0 0.0
    %488 = vmatprep.subr.mxu0 0.0
    %489 = vmatpush2.msra.mxu0 0.0
    %490 = vmatprep.subr.mxu0 0.0
    %491 = vmatpush2.msra.mxu0 0.0
    %492 = vmatprep.subr.mxu0 0.0
    %493 = vmatpush2.msra.mxu0 0.0
    %494 = vmatprep.subr.mxu0 0.0
    %495 = vmatpush2.msra.mxu0 0.0
    %496 = vmatprep.subr.mxu0 0.0
    %497 = vmatpush2.msra.mxu0 0.0
    %498 = vmatprep.subr.mxu0 0.0
    %499 = vmatpush2.msra.mxu0 0.0
    %500 = vmatprep.subr.mxu0 0.0
    %501 = vmatpush2.msra.mxu0 0.0
    %502 = vmatprep.subr.mxu0 0.0
    %503 = vmatpush2.msra.mxu0 0.0
    %504 = vmatprep.subr.mxu0 0.0
    %505 = vmatpush2.msra.mxu0 0.0
    %506 = vmatprep.subr.mxu0 0.0
    %507 = vmatpush2.msra.mxu0 0.0
    %508 = vmatprep.subr.mxu0 0.0
    %509 = vmatpush2.msra.mxu0 0.0
    %510 = vmatprep.mubr.f32.mxu0 0.0
    %v511 = vand.u32 %v79, 4294901760
    %512 = vmatmul.mubr.f32.gmra.mxu0 %v511
    %v513 = vpop.f32.mrf.mxu0
    %v514 = vadd.f32 %v426, %v513
    %v515 = vpop.f32.mrf.mxu0
    %516 = vmatprep.mubr.f32.mxu0 0.0
    %v517 = vand.u32 %v82, 4294901760
    %518 = vmatmul.mubr.f32.gmra.mxu0 %v517
    %v519 = vpop.f32.mrf.mxu0
    %v520 = vadd.f32 %v434, %v519
    %v521 = vpop.f32.mrf.mxu0
    %522 = vdwg.mxu0
    %523 = vmatprep.subr.mxu0 0.0
    %524 = vmatpush1.msra.mxu0 0.0
    %525 = vmatprep.subr.mxu0 0.0
    %526 = vmatpush1.msra.mxu0 0.0
    %527 = vmatprep.subr.mxu0 0.0
    %528 = vmatpush1.msra.mxu0 0.0
    %529 = vmatprep.subr.mxu0 0.0
    %530 = vmatpush1.msra.mxu0 0.0
    %531 = vmatprep.subr.mxu0 0.0
    %532 = vmatpush1.msra.mxu0 0.0
    %533 = vmatprep.subr.mxu0 0.0
    %534 = vmatpush1.msra.mxu0 0.0
    %535 = vmatprep.subr.mxu0 0.0
    %536 = vmatpush1.msra.mxu0 0.0
    %537 = vmatprep.subr.mxu0 0.0
    %538 = vmatpush1.msra.mxu0 0.0
    %539 = vmatprep.subr.mxu0 0.0
    %540 = vmatpush1.msra.mxu0 0.0
    %541 = vmatprep.subr.mxu0 0.0
    %542 = vmatpush1.msra.mxu0 0.0
    %543 = vmatprep.subr.mxu0 0.0
    %544 = vmatpush1.msra.mxu0 0.0
    %545 = vmatprep.subr.mxu0 0.0
    %546 = vmatpush1.msra.mxu0 0.0
    %547 = vmatprep.subr.mxu0 0.0
    %548 = vmatpush1.msra.mxu0 0.0
    %549 = vmatprep.subr.mxu0 0.0
    %v550 = vand.u32 %v86, 4294901760
    %551 = vmatpush1.msra.mxu0 %v550
    %552 = vmatprep.subr.mxu0 0.0
    %v553 = vand.u32 %v75, 4294901760
    %554 = vmatpush1.msra.mxu0 %v553
    %555 = vmatprep.subr.mxu0 0.0
    %v556 = vand.u32 %v74, 4294901760
    %557 = vmatpush1.msra.mxu0 %v556
    %558 = vmatprep.subr.mxu0 0.0
    %559 = vmatpush2.msra.mxu0 0.0
    %560 = vmatprep.subr.mxu0 0.0
    %561 = vmatpush2.msra.mxu0 0.0
    %562 = vmatprep.subr.mxu0 0.0
    %563 = vmatpush2.msra.mxu0 0.0
    %564 = vmatprep.subr.mxu0 0.0
    %565 = vmatpush2.msra.mxu0 0.0
    %566 = vmatprep.subr.mxu0 0.0
    %567 = vmatpush2.msra.mxu0 0.0
    %568 = vmatprep.subr.mxu0 0.0
    %569 = vmatpush2.msra.mxu0 0.0
    %570 = vmatprep.subr.mxu0 0.0
    %571 = vmatpush2.msra.mxu0 0.0
    %572 = vmatprep.subr.mxu0 0.0
    %573 = vmatpush2.msra.mxu0 0.0
    %574 = vmatprep.subr.mxu0 0.0
    %575 = vmatpush2.msra.mxu0 0.0
    %576 = vmatprep.subr.mxu0 0.0
    %577 = vmatpush2.msra.mxu0 0.0
    %578 = vmatprep.subr.mxu0 0.0
    %579 = vmatpush2.msra.mxu0 0.0
    %580 = vmatprep.subr.mxu0 0.0
    %581 = vmatpush2.msra.mxu0 0.0
    %582 = vmatprep.subr.mxu0 0.0
    %583 = vmatpush2.msra.mxu0 0.0
    %584 = vmatprep.subr.mxu0 0.0
    %585 = vmatpush2.msra.mxu0 0.0
    %586 = vmatprep.subr.mxu0 0.0
    %587 = vmatpush2.msra.mxu0 0.0
    %588 = vmatprep.subr.mxu0 0.0
    %589 = vmatpush2.msra.mxu0 0.0
    %590 = vmatprep.mubr.f32.mxu0 0.0
    %v591 = vand.u32 %v79, 4294901760
    %592 = vmatmul.mubr.f32.gmra.mxu0 %v591
    %v593 = vpop.f32.mrf.mxu0
    %v594 = vadd.f32 %v514, %v593
    %v595 = vpop.f32.mrf.mxu0
    %596 = vmatprep.mubr.f32.mxu0 0.0
    %v597 = vand.u32 %v82, 4294901760
    %598 = vmatmul.mubr.f32.gmra.mxu0 %v597
    %v599 = vpop.f32.mrf.mxu0
    %v600 = vadd.f32 %v520, %v599
    %v601 = vpop.f32.mrf.mxu0
    %602 = vdwg.mxu0
    %vm603 = vcmask 130048
    %v605 = vsel %vm603, %v68, 0
    %v608 = vsel %vm603, %v69, 0
    %610 = vmatprep.subr.mxu0 0.0
    %611 = vmatpush1.msra.mxu0 0.0
    %612 = vmatprep.subr.mxu0 0.0
    %613 = vmatpush1.msra.mxu0 0.0
    %614 = vmatprep.subr.mxu0 0.0
    %615 = vmatpush1.msra.mxu0 0.0
    %616 = vmatprep.subr.mxu0 0.0
    %617 = vmatpush1.msra.mxu0 0.0
    %618 = vmatprep.subr.mxu0 0.0
    %619 = vmatpush1.msra.mxu0 0.0
    %620 = vmatprep.subr.mxu0 0.0
    %621 = vmatpush1.msra.mxu0 0.0
    %622 = vmatprep.subr.mxu0 0.0
    %623 = vmatpush1.msra.mxu0 0.0
    %624 = vmatprep.subr.mxu0 0.0
    %625 = vmatpush1.msra.mxu0 0.0
    %626 = vmatprep.subr.mxu0 0.0
    %627 = vmatpush1.msra.mxu0 0.0
    %628 = vmatprep.subr.mxu0 0.0
    %629 = vmatpush1.msra.mxu0 0.0
    %630 = vmatprep.subr.mxu0 0.0
    %631 = vmatpush1.msra.mxu0 0.0
    %632 = vmatprep.subr.mxu0 0.0
    %633 = vmatpush1.msra.mxu0 0.0
    %634 = vmatprep.subr.mxu0 0.0
    %635 = vmatpush1.msra.mxu0 0.0
    %636 = vmatprep.subr.mxu0 0.0
    %637 = vmatpush1.msra.mxu0 0.0
    %638 = vmatprep.subr.mxu0 0.0
    %v639 = vand.u32 %v71, 4294901760
    %640 = vmatpush1.msra.mxu0 %v639
    %641 = vmatprep.subr.mxu0 0.0
    %v642 = vand.u32 %v70, 4294901760
    %643 = vmatpush1.msra.mxu0 %v642
    %644 = vmatprep.subr.mxu0 0.0
    %645 = vmatpush2.msra.mxu0 0.0
    %646 = vmatprep.subr.mxu0 0.0
    %647 = vmatpush2.msra.mxu0 0.0
    %648 = vmatprep.subr.mxu0 0.0
    %649 = vmatpush2.msra.mxu0 0.0
    %650 = vmatprep.subr.mxu0 0.0
    %651 = vmatpush2.msra.mxu0 0.0
    %652 = vmatprep.subr.mxu0 0.0
    %653 = vmatpush2.msra.mxu0 0.0
    %654 = vmatprep.subr.mxu0 0.0
    %655 = vmatpush2.msra.mxu0 0.0
    %656 = vmatprep.subr.mxu0 0.0
    %657 = vmatpush2.msra.mxu0 0.0
    %658 = vmatprep.subr.mxu0 0.0
    %659 = vmatpush2.msra.mxu0 0.0
    %660 = vmatprep.subr.mxu0 0.0
    %661 = vmatpush2.msra.mxu0 0.0
    %662 = vmatprep.subr.mxu0 0.0
    %663 = vmatpush2.msra.mxu0 0.0
    %664 = vmatprep.subr.mxu0 0.0
    %665 = vmatpush2.msra.mxu0 0.0
    %666 = vmatprep.subr.mxu0 0.0
    %667 = vmatpush2.msra.mxu0 0.0
    %668 = vmatprep.subr.mxu0 0.0
    %669 = vmatpush2.msra.mxu0 0.0
    %670 = vmatprep.subr.mxu0 0.0
    %671 = vmatpush2.msra.mxu0 0.0
    %672 = vmatprep.subr.mxu0 0.0
    %673 = vmatpush2.msra.mxu0 0.0
    %674 = vmatprep.subr.mxu0 0.0
    %675 = vmatpush2.msra.mxu0 0.0
    %676 = vmatprep.mubr.f32.mxu0 0.0
    %v677 = vand.u32 %v605, 4294901760
    %v678 = vsub.f32 %v605, %v677
    %v679 = vand.u32 %v678, 4294901760
    %v680 = vsub.f32 %v678, %v679
    %v681 = vand.u32 %v680, 4294901760
    %682 = vmatmul.mubr.f32.gmra.mxu0 %v681
    %v683 = vpop.f32.mrf.mxu0
    %v684 = vadd.f32 %v594, %v683
    %v685 = vpop.f32.mrf.mxu0
    %686 = vmatprep.mubr.f32.mxu0 0.0
    %v687 = vand.u32 %v608, 4294901760
    %v688 = vsub.f32 %v608, %v687
    %v689 = vand.u32 %v688, 4294901760
    %v690 = vsub.f32 %v688, %v689
    %v691 = vand.u32 %v690, 4294901760
    %692 = vmatmul.mubr.f32.gmra.mxu0 %v691
    %v693 = vpop.f32.mrf.mxu0
    %v694 = vadd.f32 %v600, %v693
    %v695 = vpop.f32.mrf.mxu0
    %696 = vdwg.mxu0
    %697 = vmatprep.subr.mxu0 0.0
    %698 = vmatpush1.msra.mxu0 0.0
    %699 = vmatprep.subr.mxu0 0.0
    %700 = vmatpush1.msra.mxu0 0.0
    %701 = vmatprep.subr.mxu0 0.0
    %702 = vmatpush1.msra.mxu0 0.0
    %703 = vmatprep.subr.mxu0 0.0
    %704 = vmatpush1.msra.mxu0 0.0
    %705 = vmatprep.subr.mxu0 0.0
    %706 = vmatpush1.msra.mxu0 0.0
    %707 = vmatprep.subr.mxu0 0.0
    %708 = vmatpush1.msra.mxu0 0.0
    %709 = vmatprep.subr.mxu0 0.0
    %710 = vmatpush1.msra.mxu0 0.0
    %711 = vmatprep.subr.mxu0 0.0
    %712 = vmatpush1.msra.mxu0 0.0
    %713 = vmatprep.subr.mxu0 0.0
    %714 = vmatpush1.msra.mxu0 0.0
    %715 = vmatprep.subr.mxu0 0.0
    %716 = vmatpush1.msra.mxu0 0.0
    %717 = vmatprep.subr.mxu0 0.0
    %718 = vmatpush1.msra.mxu0 0.0
    %719 = vmatprep.subr.mxu0 0.0
    %720 = vmatpush1.msra.mxu0 0.0
    %721 = vmatprep.subr.mxu0 0.0
    %722 = vmatpush1.msra.mxu0 0.0
    %723 = vmatprep.subr.mxu0 0.0
    %724 = vmatpush1.msra.mxu0 0.0
    %725 = vmatprep.subr.mxu0 0.0
    %v726 = vand.u32 %v71, 4294901760
    %v727 = vsub.f32 %v71, %v726
    %v728 = vand.u32 %v727, 4294901760
    %v729 = vsub.f32 %v727, %v728
    %v730 = vand.u32 %v729, 4294901760
    %731 = vmatpush1.msra.mxu0 %v730
    %732 = vmatprep.subr.mxu0 0.0
    %v733 = vand.u32 %v70, 4294901760
    %v734 = vsub.f32 %v70, %v733
    %v735 = vand.u32 %v734, 4294901760
    %v736 = vsub.f32 %v734, %v735
    %v737 = vand.u32 %v736, 4294901760
    %738 = vmatpush1.msra.mxu0 %v737
    %739 = vmatprep.subr.mxu0 0.0
    %740 = vmatpush2.msra.mxu0 0.0
    %741 = vmatprep.subr.mxu0 0.0
    %742 = vmatpush2.msra.mxu0 0.0
    %743 = vmatprep.subr.mxu0 0.0
    %744 = vmatpush2.msra.mxu0 0.0
    %745 = vmatprep.subr.mxu0 0.0
    %746 = vmatpush2.msra.mxu0 0.0
    %747 = vmatprep.subr.mxu0 0.0
    %748 = vmatpush2.msra.mxu0 0.0
    %749 = vmatprep.subr.mxu0 0.0
    %750 = vmatpush2.msra.mxu0 0.0
    %751 = vmatprep.subr.mxu0 0.0
    %752 = vmatpush2.msra.mxu0 0.0
    %753 = vmatprep.subr.mxu0 0.0
    %754 = vmatpush2.msra.mxu0 0.0
    %755 = vmatprep.subr.mxu0 0.0
    %756 = vmatpush2.msra.mxu0 0.0
    %757 = vmatprep.subr.mxu0 0.0
    %758 = vmatpush2.msra.mxu0 0.0
    %759 = vmatprep.subr.mxu0 0.0
    %760 = vmatpush2.msra.mxu0 0.0
    %761 = vmatprep.subr.mxu0 0.0
    %762 = vmatpush2.msra.mxu0 0.0
    %763 = vmatprep.subr.mxu0 0.0
    %764 = vmatpush2.msra.mxu0 0.0
    %765 = vmatprep.subr.mxu0 0.0
    %766 = vmatpush2.msra.mxu0 0.0
    %767 = vmatprep.subr.mxu0 0.0
    %768 = vmatpush2.msra.mxu0 0.0
    %769 = vmatprep.subr.mxu0 0.0
    %770 = vmatpush2.msra.mxu0 0.0
    %771 = vmatprep.mubr.f32.mxu0 0.0
    %v772 = vand.u32 %v605, 4294901760
    %773 = vmatmul.mubr.f32.gmra.mxu0 %v772
    %v774 = vpop.f32.mrf.mxu0
    %v775 = vadd.f32 %v684, %v774
    %v776 = vpop.f32.mrf.mxu0
    %777 = vmatprep.mubr.f32.mxu0 0.0
    %v778 = vand.u32 %v608, 4294901760
    %779 = vmatmul.mubr.f32.gmra.mxu0 %v778
    %v780 = vpop.f32.mrf.mxu0
    %v781 = vadd.f32 %v694, %v780
    %v782 = vpop.f32.mrf.mxu0
    %783 = vdwg.mxu0
    %784 = vmatprep.subr.mxu0 0.0
    %785 = vmatpush1.msra.mxu0 0.0
    %786 = vmatprep.subr.mxu0 0.0
    %787 = vmatpush1.msra.mxu0 0.0
    %788 = vmatprep.subr.mxu0 0.0
    %789 = vmatpush1.msra.mxu0 0.0
    %790 = vmatprep.subr.mxu0 0.0
    %791 = vmatpush1.msra.mxu0 0.0
    %792 = vmatprep.subr.mxu0 0.0
    %793 = vmatpush1.msra.mxu0 0.0
    %794 = vmatprep.subr.mxu0 0.0
    %795 = vmatpush1.msra.mxu0 0.0
    %796 = vmatprep.subr.mxu0 0.0
    %797 = vmatpush1.msra.mxu0 0.0
    %798 = vmatprep.subr.mxu0 0.0
    %799 = vmatpush1.msra.mxu0 0.0
    %800 = vmatprep.subr.mxu0 0.0
    %801 = vmatpush1.msra.mxu0 0.0
    %802 = vmatprep.subr.mxu0 0.0
    %803 = vmatpush1.msra.mxu0 0.0
    %804 = vmatprep.subr.mxu0 0.0
    %805 = vmatpush1.msra.mxu0 0.0
    %806 = vmatprep.subr.mxu0 0.0
    %807 = vmatpush1.msra.mxu0 0.0
    %808 = vmatprep.subr.mxu0 0.0
    %809 = vmatpush1.msra.mxu0 0.0
    %810 = vmatprep.subr.mxu0 0.0
    %811 = vmatpush1.msra.mxu0 0.0
    %812 = vmatprep.subr.mxu0 0.0
    %v813 = vand.u32 %v71, 4294901760
    %v814 = vsub.f32 %v71, %v813
    %815 = vmatpush1.msra.mxu0 %v814
    %816 = vmatprep.subr.mxu0 0.0
    %v817 = vand.u32 %v70, 4294901760
    %v818 = vsub.f32 %v70, %v817
    %819 = vmatpush1.msra.mxu0 %v818
    %820 = vmatprep.subr.mxu0 0.0
    %821 = vmatpush2.msra.mxu0 0.0
    %822 = vmatprep.subr.mxu0 0.0
    %823 = vmatpush2.msra.mxu0 0.0
    %824 = vmatprep.subr.mxu0 0.0
    %825 = vmatpush2.msra.mxu0 0.0
    %826 = vmatprep.subr.mxu0 0.0
    %827 = vmatpush2.msra.mxu0 0.0
    %828 = vmatprep.subr.mxu0 0.0
    %829 = vmatpush2.msra.mxu0 0.0
    %830 = vmatprep.subr.mxu0 0.0
    %831 = vmatpush2.msra.mxu0 0.0
    %832 = vmatprep.subr.mxu0 0.0
    %833 = vmatpush2.msra.mxu0 0.0
    %834 = vmatprep.subr.mxu0 0.0
    %835 = vmatpush2.msra.mxu0 0.0
    %836 = vmatprep.subr.mxu0 0.0
    %837 = vmatpush2.msra.mxu0 0.0
    %838 = vmatprep.subr.mxu0 0.0
    %839 = vmatpush2.msra.mxu0 0.0
    %840 = vmatprep.subr.mxu0 0.0
    %841 = vmatpush2.msra.mxu0 0.0
    %842 = vmatprep.subr.mxu0 0.0
    %843 = vmatpush2.msra.mxu0 0.0
    %844 = vmatprep.subr.mxu0 0.0
    %845 = vmatpush2.msra.mxu0 0.0
    %846 = vmatprep.subr.mxu0 0.0
    %847 = vmatpush2.msra.mxu0 0.0
    %848 = vmatprep.subr.mxu0 0.0
    %849 = vmatpush2.msra.mxu0 0.0
    %850 = vmatprep.subr.mxu0 0.0
    %851 = vmatpush2.msra.mxu0 0.0
    %852 = vmatprep.mubr.f32.mxu0 0.0
    %v853 = vand.u32 %v605, 4294901760
    %v854 = vsub.f32 %v605, %v853
    %855 = vmatmul.mubr.f32.gmra.mxu0 %v854
    %v856 = vpop.f32.mrf.mxu0
    %v857 = vadd.f32 %v775, %v856
    %v858 = vpop.f32.mrf.mxu0
    %859 = vmatprep.mubr.f32.mxu0 0.0
    %v860 = vand.u32 %v608, 4294901760
    %v861 = vsub.f32 %v608, %v860
    %862 = vmatmul.mubr.f32.gmra.mxu0 %v861
    %v863 = vpop.f32.mrf.mxu0
    %v864 = vadd.f32 %v781, %v863
    %v865 = vpop.f32.mrf.mxu0
    %866 = vdwg.mxu0
    %867 = vmatprep.subr.mxu0 0.0
    %868 = vmatpush1.msra.mxu0 0.0
    %869 = vmatprep.subr.mxu0 0.0
    %870 = vmatpush1.msra.mxu0 0.0
    %871 = vmatprep.subr.mxu0 0.0
    %872 = vmatpush1.msra.mxu0 0.0
    %873 = vmatprep.subr.mxu0 0.0
    %874 = vmatpush1.msra.mxu0 0.0
    %875 = vmatprep.subr.mxu0 0.0
    %876 = vmatpush1.msra.mxu0 0.0
    %877 = vmatprep.subr.mxu0 0.0
    %878 = vmatpush1.msra.mxu0 0.0
    %879 = vmatprep.subr.mxu0 0.0
    %880 = vmatpush1.msra.mxu0 0.0
    %881 = vmatprep.subr.mxu0 0.0
    %882 = vmatpush1.msra.mxu0 0.0
    %883 = vmatprep.subr.mxu0 0.0
    %884 = vmatpush1.msra.mxu0 0.0
    %885 = vmatprep.subr.mxu0 0.0
    %886 = vmatpush1.msra.mxu0 0.0
    %887 = vmatprep.subr.mxu0 0.0
    %888 = vmatpush1.msra.mxu0 0.0
    %889 = vmatprep.subr.mxu0 0.0
    %890 = vmatpush1.msra.mxu0 0.0
    %891 = vmatprep.subr.mxu0 0.0
    %892 = vmatpush1.msra.mxu0 0.0
    %893 = vmatprep.subr.mxu0 0.0
    %894 = vmatpush1.msra.mxu0 0.0
    %895 = vmatprep.subr.mxu0 0.0
    %v896 = vand.u32 %v71, 4294901760
    %897 = vmatpush1.msra.mxu0 %v896
    %898 = vmatprep.subr.mxu0 0.0
    %v899 = vand.u32 %v70, 4294901760
    %900 = vmatpush1.msra.mxu0 %v899
    %901 = vmatprep.subr.mxu0 0.0
    %902 = vmatpush2.msra.mxu0 0.0
    %903 = vmatprep.subr.mxu0 0.0
    %904 = vmatpush2.msra.mxu0 0.0
    %905 = vmatprep.subr.mxu0 0.0
    %906 = vmatpush2.msra.mxu0 0.0
    %907 = vmatprep.subr.mxu0 0.0
    %908 = vmatpush2.msra.mxu0 0.0
    %909 = vmatprep.subr.mxu0 0.0
    %910 = vmatpush2.msra.mxu0 0.0
    %911 = vmatprep.subr.mxu0 0.0
    %912 = vmatpush2.msra.mxu0 0.0
    %913 = vmatprep.subr.mxu0 0.0
    %914 = vmatpush2.msra.mxu0 0.0
    %915 = vmatprep.subr.mxu0 0.0
    %916 = vmatpush2.msra.mxu0 0.0
    %917 = vmatprep.subr.mxu0 0.0
    %918 = vmatpush2.msra.mxu0 0.0
    %919 = vmatprep.subr.mxu0 0.0
    %920 = vmatpush2.msra.mxu0 0.0
    %921 = vmatprep.subr.mxu0 0.0
    %922 = vmatpush2.msra.mxu0 0.0
    %923 = vmatprep.subr.mxu0 0.0
    %924 = vmatpush2.msra.mxu0 0.0
    %925 = vmatprep.subr.mxu0 0.0
    %926 = vmatpush2.msra.mxu0 0.0
    %927 = vmatprep.subr.mxu0 0.0
    %928 = vmatpush2.msra.mxu0 0.0
    %929 = vmatprep.subr.mxu0 0.0
    %930 = vmatpush2.msra.mxu0 0.0
    %931 = vmatprep.subr.mxu0 0.0
    %932 = vmatpush2.msra.mxu0 0.0
    %933 = vmatprep.mubr.f32.mxu0 0.0
    %v934 = vand.u32 %v605, 4294901760
    %v935 = vsub.f32 %v605, %v934
    %v936 = vand.u32 %v935, 4294901760
    %937 = vmatmul.mubr.f32.gmra.mxu0 %v936
    %v938 = vpop.f32.mrf.mxu0
    %v939 = vadd.f32 %v857, %v938
    %v940 = vpop.f32.mrf.mxu0
    %941 = vmatprep.mubr.f32.mxu0 0.0
    %v942 = vand.u32 %v608, 4294901760
    %v943 = vsub.f32 %v608, %v942
    %v944 = vand.u32 %v943, 4294901760
    %945 = vmatmul.mubr.f32.gmra.mxu0 %v944
    %v946 = vpop.f32.mrf.mxu0
    %v947 = vadd.f32 %v864, %v946
    %v948 = vpop.f32.mrf.mxu0
    %949 = vdwg.mxu0
    %950 = vmatprep.subr.mxu0 0.0
    %951 = vmatpush1.msra.mxu0 0.0
    %952 = vmatprep.subr.mxu0 0.0
    %953 = vmatpush1.msra.mxu0 0.0
    %954 = vmatprep.subr.mxu0 0.0
    %955 = vmatpush1.msra.mxu0 0.0
    %956 = vmatprep.subr.mxu0 0.0
    %957 = vmatpush1.msra.mxu0 0.0
    %958 = vmatprep.subr.mxu0 0.0
    %959 = vmatpush1.msra.mxu0 0.0
    %960 = vmatprep.subr.mxu0 0.0
    %961 = vmatpush1.msra.mxu0 0.0
    %962 = vmatprep.subr.mxu0 0.0
    %963 = vmatpush1.msra.mxu0 0.0
    %964 = vmatprep.subr.mxu0 0.0
    %965 = vmatpush1.msra.mxu0 0.0
    %966 = vmatprep.subr.mxu0 0.0
    %967 = vmatpush1.msra.mxu0 0.0
    %968 = vmatprep.subr.mxu0 0.0
    %969 = vmatpush1.msra.mxu0 0.0
    %970 = vmatprep.subr.mxu0 0.0
    %971 = vmatpush1.msra.mxu0 0.0
    %972 = vmatprep.subr.mxu0 0.0
    %973 = vmatpush1.msra.mxu0 0.0
    %974 = vmatprep.subr.mxu0 0.0
    %975 = vmatpush1.msra.mxu0 0.0
    %976 = vmatprep.subr.mxu0 0.0
    %977 = vmatpush1.msra.mxu0 0.0
    %978 = vmatprep.subr.mxu0 0.0
    %v979 = vand.u32 %v71, 4294901760
    %v980 = vsub.f32 %v71, %v979
    %v981 = vand.u32 %v980, 4294901760
    %982 = vmatpush1.msra.mxu0 %v981
    %983 = vmatprep.subr.mxu0 0.0
    %v984 = vand.u32 %v70, 4294901760
    %v985 = vsub.f32 %v70, %v984
    %v986 = vand.u32 %v985, 4294901760
    %987 = vmatpush1.msra.mxu0 %v986
    %988 = vmatprep.subr.mxu0 0.0
    %989 = vmatpush2.msra.mxu0 0.0
    %990 = vmatprep.subr.mxu0 0.0
    %991 = vmatpush2.msra.mxu0 0.0
    %992 = vmatprep.subr.mxu0 0.0
    %993 = vmatpush2.msra.mxu0 0.0
    %994 = vmatprep.subr.mxu0 0.0
    %995 = vmatpush2.msra.mxu0 0.0
    %996 = vmatprep.subr.mxu0 0.0
    %997 = vmatpush2.msra.mxu0 0.0
    %998 = vmatprep.subr.mxu0 0.0
    %999 = vmatpush2.msra.mxu0 0.0
    %1000 = vmatprep.subr.mxu0 0.0
    %1001 = vmatpush2.msra.mxu0 0.0
    %1002 = vmatprep.subr.mxu0 0.0
    %1003 = vmatpush2.msra.mxu0 0.0
    %1004 = vmatprep.subr.mxu0 0.0
    %1005 = vmatpush2.msra.mxu0 0.0
    %1006 = vmatprep.subr.mxu0 0.0
    %1007 = vmatpush2.msra.mxu0 0.0
    %1008 = vmatprep.subr.mxu0 0.0
    %1009 = vmatpush2.msra.mxu0 0.0
    %1010 = vmatprep.subr.mxu0 0.0
    %1011 = vmatpush2.msra.mxu0 0.0
    %1012 = vmatprep.subr.mxu0 0.0
    %1013 = vmatpush2.msra.mxu0 0.0
    %1014 = vmatprep.subr.mxu0 0.0
    %1015 = vmatpush2.msra.mxu0 0.0
    %1016 = vmatprep.subr.mxu0 0.0
    %1017 = vmatpush2.msra.mxu0 0.0
    %1018 = vmatprep.subr.mxu0 0.0
    %1019 = vmatpush2.msra.mxu0 0.0
    %1020 = vmatprep.mubr.f32.mxu0 0.0
    %v1021 = vand.u32 %v605, 4294901760
    %1022 = vmatmul.mubr.f32.gmra.mxu0 %v1021
    %v1023 = vpop.f32.mrf.mxu0
    %v1024 = vadd.f32 %v939, %v1023
    %v1025 = vpop.f32.mrf.mxu0
    %1026 = vmatprep.mubr.f32.mxu0 0.0
    %v1027 = vand.u32 %v608, 4294901760
    %1028 = vmatmul.mubr.f32.gmra.mxu0 %v1027
    %v1029 = vpop.f32.mrf.mxu0
    %v1030 = vadd.f32 %v947, %v1029
    %v1031 = vpop.f32.mrf.mxu0
    %1032 = vdwg.mxu0
    %1033 = vmatprep.subr.mxu0 0.0
    %1034 = vmatpush1.msra.mxu0 0.0
    %1035 = vmatprep.subr.mxu0 0.0
    %1036 = vmatpush1.msra.mxu0 0.0
    %1037 = vmatprep.subr.mxu0 0.0
    %1038 = vmatpush1.msra.mxu0 0.0
    %1039 = vmatprep.subr.mxu0 0.0
    %1040 = vmatpush1.msra.mxu0 0.0
    %1041 = vmatprep.subr.mxu0 0.0
    %1042 = vmatpush1.msra.mxu0 0.0
    %1043 = vmatprep.subr.mxu0 0.0
    %1044 = vmatpush1.msra.mxu0 0.0
    %1045 = vmatprep.subr.mxu0 0.0
    %1046 = vmatpush1.msra.mxu0 0.0
    %1047 = vmatprep.subr.mxu0 0.0
    %1048 = vmatpush1.msra.mxu0 0.0
    %1049 = vmatprep.subr.mxu0 0.0
    %1050 = vmatpush1.msra.mxu0 0.0
    %1051 = vmatprep.subr.mxu0 0.0
    %1052 = vmatpush1.msra.mxu0 0.0
    %1053 = vmatprep.subr.mxu0 0.0
    %1054 = vmatpush1.msra.mxu0 0.0
    %1055 = vmatprep.subr.mxu0 0.0
    %1056 = vmatpush1.msra.mxu0 0.0
    %1057 = vmatprep.subr.mxu0 0.0
    %1058 = vmatpush1.msra.mxu0 0.0
    %1059 = vmatprep.subr.mxu0 0.0
    %1060 = vmatpush1.msra.mxu0 0.0
    %1061 = vmatprep.subr.mxu0 0.0
    %v1062 = vand.u32 %v71, 4294901760
    %1063 = vmatpush1.msra.mxu0 %v1062
    %1064 = vmatprep.subr.mxu0 0.0
    %v1065 = vand.u32 %v70, 4294901760
    %1066 = vmatpush1.msra.mxu0 %v1065
    %1067 = vmatprep.subr.mxu0 0.0
    %1068 = vmatpush2.msra.mxu0 0.0
    %1069 = vmatprep.subr.mxu0 0.0
    %1070 = vmatpush2.msra.mxu0 0.0
    %1071 = vmatprep.subr.mxu0 0.0
    %1072 = vmatpush2.msra.mxu0 0.0
    %1073 = vmatprep.subr.mxu0 0.0
    %1074 = vmatpush2.msra.mxu0 0.0
    %1075 = vmatprep.subr.mxu0 0.0
    %1076 = vmatpush2.msra.mxu0 0.0
    %1077 = vmatprep.subr.mxu0 0.0
    %1078 = vmatpush2.msra.mxu0 0.0
    %1079 = vmatprep.subr.mxu0 0.0
    %1080 = vmatpush2.msra.mxu0 0.0
    %1081 = vmatprep.subr.mxu0 0.0
    %1082 = vmatpush2.msra.mxu0 0.0
    %1083 = vmatprep.subr.mxu0 0.0
    %1084 = vmatpush2.msra.mxu0 0.0
    %1085 = vmatprep.subr.mxu0 0.0
    %1086 = vmatpush2.msra.mxu0 0.0
    %1087 = vmatprep.subr.mxu0 0.0
    %1088 = vmatpush2.msra.mxu0 0.0
    %1089 = vmatprep.subr.mxu0 0.0
    %1090 = vmatpush2.msra.mxu0 0.0
    %1091 = vmatprep.subr.mxu0 0.0
    %1092 = vmatpush2.msra.mxu0 0.0
    %1093 = vmatprep.subr.mxu0 0.0
    %1094 = vmatpush2.msra.mxu0 0.0
    %1095 = vmatprep.subr.mxu0 0.0
    %1096 = vmatpush2.msra.mxu0 0.0
    %1097 = vmatprep.subr.mxu0 0.0
    %1098 = vmatpush2.msra.mxu0 0.0
    %1099 = vmatprep.mubr.f32.mxu0 0.0
    %v1100 = vand.u32 %v605, 4294901760
    %1101 = vmatmul.mubr.f32.gmra.mxu0 %v1100
    %v1102 = vpop.f32.mrf.mxu0
    %v1103 = vadd.f32 %v1024, %v1102
    %v1104 = vpop.f32.mrf.mxu0
    %1105 = vmatprep.mubr.f32.mxu0 0.0
    %v1106 = vand.u32 %v608, 4294901760
    %1107 = vmatmul.mubr.f32.gmra.mxu0 %v1106
    %v1108 = vpop.f32.mrf.mxu0
    %v1109 = vadd.f32 %v1030, %v1108
    %v1110 = vpop.f32.mrf.mxu0
    %1111 = vdwg.mxu0
    %v1112 = vld [vmem:[%s2] sm:$0xff]
    %v1113 = vld [vmem:[%s2 + $0x8] sm:$0xff]
    %v1114 = vld [vmem:[%s5] sm:$0xf]
    %vm1115 = vcmask 31744
    %v1117 = vsel %vm1115, %v1112, 0
    %v1120 = vsel %vm1115, %v1113, 0
    %v1123 = vsel %vm84, %v1114, 0
    %1125 = vmatprep.subr.mxu0 0.0
    %1126 = vmatpush1.msra.mxu0 0.0
    %1127 = vmatprep.subr.mxu0 0.0
    %1128 = vmatpush1.msra.mxu0 0.0
    %1129 = vmatprep.subr.mxu0 0.0
    %1130 = vmatpush1.msra.mxu0 0.0
    %1131 = vmatprep.subr.mxu0 0.0
    %1132 = vmatpush1.msra.mxu0 0.0
    %1133 = vmatprep.subr.mxu0 0.0
    %1134 = vmatpush1.msra.mxu0 0.0
    %1135 = vmatprep.subr.mxu0 0.0
    %1136 = vmatpush1.msra.mxu0 0.0
    %1137 = vmatprep.subr.mxu0 0.0
    %1138 = vmatpush1.msra.mxu0 0.0
    %1139 = vmatprep.subr.mxu0 0.0
    %1140 = vmatpush1.msra.mxu0 0.0
    %1141 = vmatprep.subr.mxu0 0.0
    %1142 = vmatpush1.msra.mxu0 0.0
    %1143 = vmatprep.subr.mxu0 0.0
    %1144 = vmatpush1.msra.mxu0 0.0
    %1145 = vmatprep.subr.mxu0 0.0
    %1146 = vmatpush1.msra.mxu0 0.0
    %1147 = vmatprep.subr.mxu0 0.0
    %1148 = vmatpush1.msra.mxu0 0.0
    %1149 = vmatprep.subr.mxu0 0.0
    %1150 = vmatpush1.msra.mxu0 0.0
    %1151 = vmatprep.subr.mxu0 0.0
    %1152 = vmatpush1.msra.mxu0 0.0
    %1153 = vmatprep.subr.mxu0 0.0
    %1154 = vmatpush1.msra.mxu0 0.0
    %1155 = vmatprep.subr.mxu0 0.0
    %v1156 = vand.u32 %v1123, 4294901760
    %1157 = vmatpush1.msra.mxu0 %v1156
    %1158 = vmatprep.subr.mxu0 0.0
    %1159 = vmatpush2.msra.mxu0 0.0
    %1160 = vmatprep.subr.mxu0 0.0
    %1161 = vmatpush2.msra.mxu0 0.0
    %1162 = vmatprep.subr.mxu0 0.0
    %1163 = vmatpush2.msra.mxu0 0.0
    %1164 = vmatprep.subr.mxu0 0.0
    %1165 = vmatpush2.msra.mxu0 0.0
    %1166 = vmatprep.subr.mxu0 0.0
    %1167 = vmatpush2.msra.mxu0 0.0
    %1168 = vmatprep.subr.mxu0 0.0
    %1169 = vmatpush2.msra.mxu0 0.0
    %1170 = vmatprep.subr.mxu0 0.0
    %1171 = vmatpush2.msra.mxu0 0.0
    %1172 = vmatprep.subr.mxu0 0.0
    %1173 = vmatpush2.msra.mxu0 0.0
    %1174 = vmatprep.subr.mxu0 0.0
    %1175 = vmatpush2.msra.mxu0 0.0
    %1176 = vmatprep.subr.mxu0 0.0
    %1177 = vmatpush2.msra.mxu0 0.0
    %1178 = vmatprep.subr.mxu0 0.0
    %1179 = vmatpush2.msra.mxu0 0.0
    %1180 = vmatprep.subr.mxu0 0.0
    %1181 = vmatpush2.msra.mxu0 0.0
    %1182 = vmatprep.subr.mxu0 0.0
    %1183 = vmatpush2.msra.mxu0 0.0
    %1184 = vmatprep.subr.mxu0 0.0
    %1185 = vmatpush2.msra.mxu0 0.0
    %1186 = vmatprep.subr.mxu0 0.0
    %1187 = vmatpush2.msra.mxu0 0.0
    %1188 = vmatprep.subr.mxu0 0.0
    %1189 = vmatpush2.msra.mxu0 0.0
    %1190 = vmatprep.mubr.f32.mxu0 0.0
    %v1191 = vand.u32 %v1117, 4294901760
    %v1192 = vsub.f32 %v1117, %v1191
    %v1193 = vand.u32 %v1192, 4294901760
    %v1194 = vsub.f32 %v1192, %v1193
    %v1195 = vand.u32 %v1194, 4294901760
    %1196 = vmatmul.mubr.f32.gmra.mxu0 %v1195
    %v1197 = vpop.f32.mrf.mxu0
    %v1198 = vadd.f32 0.0, %v1197
    %v1199 = vpop.f32.mrf.mxu0
    %1200 = vmatprep.mubr.f32.mxu0 0.0
    %v1201 = vand.u32 %v1120, 4294901760
    %v1202 = vsub.f32 %v1120, %v1201
    %v1203 = vand.u32 %v1202, 4294901760
    %v1204 = vsub.f32 %v1202, %v1203
    %v1205 = vand.u32 %v1204, 4294901760
    %1206 = vmatmul.mubr.f32.gmra.mxu0 %v1205
    %v1207 = vpop.f32.mrf.mxu0
    %v1208 = vadd.f32 0.0, %v1207
    %v1209 = vpop.f32.mrf.mxu0
    %1210 = vdwg.mxu0
    %1211 = vmatprep.subr.mxu0 0.0
    %1212 = vmatpush1.msra.mxu0 0.0
    %1213 = vmatprep.subr.mxu0 0.0
    %1214 = vmatpush1.msra.mxu0 0.0
    %1215 = vmatprep.subr.mxu0 0.0
    %1216 = vmatpush1.msra.mxu0 0.0
    %1217 = vmatprep.subr.mxu0 0.0
    %1218 = vmatpush1.msra.mxu0 0.0
    %1219 = vmatprep.subr.mxu0 0.0
    %1220 = vmatpush1.msra.mxu0 0.0
    %1221 = vmatprep.subr.mxu0 0.0
    %1222 = vmatpush1.msra.mxu0 0.0
    %1223 = vmatprep.subr.mxu0 0.0
    %1224 = vmatpush1.msra.mxu0 0.0
    %1225 = vmatprep.subr.mxu0 0.0
    %1226 = vmatpush1.msra.mxu0 0.0
    %1227 = vmatprep.subr.mxu0 0.0
    %1228 = vmatpush1.msra.mxu0 0.0
    %1229 = vmatprep.subr.mxu0 0.0
    %1230 = vmatpush1.msra.mxu0 0.0
    %1231 = vmatprep.subr.mxu0 0.0
    %1232 = vmatpush1.msra.mxu0 0.0
    %1233 = vmatprep.subr.mxu0 0.0
    %1234 = vmatpush1.msra.mxu0 0.0
    %1235 = vmatprep.subr.mxu0 0.0
    %1236 = vmatpush1.msra.mxu0 0.0
    %1237 = vmatprep.subr.mxu0 0.0
    %1238 = vmatpush1.msra.mxu0 0.0
    %1239 = vmatprep.subr.mxu0 0.0
    %1240 = vmatpush1.msra.mxu0 0.0
    %1241 = vmatprep.subr.mxu0 0.0
    %v1242 = vand.u32 %v1123, 4294901760
    %v1243 = vsub.f32 %v1123, %v1242
    %v1244 = vand.u32 %v1243, 4294901760
    %v1245 = vsub.f32 %v1243, %v1244
    %v1246 = vand.u32 %v1245, 4294901760
    %1247 = vmatpush1.msra.mxu0 %v1246
    %1248 = vmatprep.subr.mxu0 0.0
    %1249 = vmatpush2.msra.mxu0 0.0
    %1250 = vmatprep.subr.mxu0 0.0
    %1251 = vmatpush2.msra.mxu0 0.0
    %1252 = vmatprep.subr.mxu0 0.0
    %1253 = vmatpush2.msra.mxu0 0.0
    %1254 = vmatprep.subr.mxu0 0.0
    %1255 = vmatpush2.msra.mxu0 0.0
    %1256 = vmatprep.subr.mxu0 0.0
    %1257 = vmatpush2.msra.mxu0 0.0
    %1258 = vmatprep.subr.mxu0 0.0
    %1259 = vmatpush2.msra.mxu0 0.0
    %1260 = vmatprep.subr.mxu0 0.0
    %1261 = vmatpush2.msra.mxu0 0.0
    %1262 = vmatprep.subr.mxu0 0.0
    %1263 = vmatpush2.msra.mxu0 0.0
    %1264 = vmatprep.subr.mxu0 0.0
    %1265 = vmatpush2.msra.mxu0 0.0
    %1266 = vmatprep.subr.mxu0 0.0
    %1267 = vmatpush2.msra.mxu0 0.0
    %1268 = vmatprep.subr.mxu0 0.0
    %1269 = vmatpush2.msra.mxu0 0.0
    %1270 = vmatprep.subr.mxu0 0.0
    %1271 = vmatpush2.msra.mxu0 0.0
    %1272 = vmatprep.subr.mxu0 0.0
    %1273 = vmatpush2.msra.mxu0 0.0
    %1274 = vmatprep.subr.mxu0 0.0
    %1275 = vmatpush2.msra.mxu0 0.0
    %1276 = vmatprep.subr.mxu0 0.0
    %1277 = vmatpush2.msra.mxu0 0.0
    %1278 = vmatprep.subr.mxu0 0.0
    %1279 = vmatpush2.msra.mxu0 0.0
    %1280 = vmatprep.mubr.f32.mxu0 0.0
    %v1281 = vand.u32 %v1117, 4294901760
    %1282 = vmatmul.mubr.f32.gmra.mxu0 %v1281
    %v1283 = vpop.f32.mrf.mxu0
    %v1284 = vadd.f32 %v1198, %v1283
    %v1285 = vpop.f32.mrf.mxu0
    %1286 = vmatprep.mubr.f32.mxu0 0.0
    %v1287 = vand.u32 %v1120, 4294901760
    %1288 = vmatmul.mubr.f32.gmra.mxu0 %v1287
    %v1289 = vpop.f32.mrf.mxu0
    %v1290 = vadd.f32 %v1208, %v1289
    %v1291 = vpop.f32.mrf.mxu0
    %1292 = vdwg.mxu0
    %1293 = vmatprep.subr.mxu0 0.0
    %1294 = vmatpush1.msra.mxu0 0.0
    %1295 = vmatprep.subr.mxu0 0.0
    %1296 = vmatpush1.msra.mxu0 0.0
    %1297 = vmatprep.subr.mxu0 0.0
    %1298 = vmatpush1.msra.mxu0 0.0
    %1299 = vmatprep.subr.mxu0 0.0
    %1300 = vmatpush1.msra.mxu0 0.0
    %1301 = vmatprep.subr.mxu0 0.0
    %1302 = vmatpush1.msra.mxu0 0.0
    %1303 = vmatprep.subr.mxu0 0.0
    %1304 = vmatpush1.msra.mxu0 0.0
    %1305 = vmatprep.subr.mxu0 0.0
    %1306 = vmatpush1.msra.mxu0 0.0
    %1307 = vmatprep.subr.mxu0 0.0
    %1308 = vmatpush1.msra.mxu0 0.0
    %1309 = vmatprep.subr.mxu0 0.0
    %1310 = vmatpush1.msra.mxu0 0.0
    %1311 = vmatprep.subr.mxu0 0.0
    %1312 = vmatpush1.msra.mxu0 0.0
    %1313 = vmatprep.subr.mxu0 0.0
    %1314 = vmatpush1.msra.mxu0 0.0
    %1315 = vmatprep.subr.mxu0 0.0
    %1316 = vmatpush1.msra.mxu0 0.0
    %1317 = vmatprep.subr.mxu0 0.0
    %1318 = vmatpush1.msra.mxu0 0.0
    %1319 = vmatprep.subr.mxu0 0.0
    %1320 = vmatpush1.msra.mxu0 0.0
    %1321 = vmatprep.subr.mxu0 0.0
    %1322 = vmatpush1.msra.mxu0 0.0
    %1323 = vmatprep.subr.mxu0 0.0
    %v1324 = vand.u32 %v1123, 4294901760
    %v1325 = vsub.f32 %v1123, %v1324
    %1326 = vmatpush1.msra.mxu0 %v1325
    %1327 = vmatprep.subr.mxu0 0.0
    %1328 = vmatpush2.msra.mxu0 0.0
    %1329 = vmatprep.subr.mxu0 0.0
    %1330 = vmatpush2.msra.mxu0 0.0
    %1331 = vmatprep.subr.mxu0 0.0
    %1332 = vmatpush2.msra.mxu0 0.0
    %1333 = vmatprep.subr.mxu0 0.0
    %1334 = vmatpush2.msra.mxu0 0.0
    %1335 = vmatprep.subr.mxu0 0.0
    %1336 = vmatpush2.msra.mxu0 0.0
    %1337 = vmatprep.subr.mxu0 0.0
    %1338 = vmatpush2.msra.mxu0 0.0
    %1339 = vmatprep.subr.mxu0 0.0
    %1340 = vmatpush2.msra.mxu0 0.0
    %1341 = vmatprep.subr.mxu0 0.0
    %1342 = vmatpush2.msra.mxu0 0.0
    %1343 = vmatprep.subr.mxu0 0.0
    %1344 = vmatpush2.msra.mxu0 0.0
    %1345 = vmatprep.subr.mxu0 0.0
    %1346 = vmatpush2.msra.mxu0 0.0
    %1347 = vmatprep.subr.mxu0 0.0
    %1348 = vmatpush2.msra.mxu0 0.0
    %1349 = vmatprep.subr.mxu0 0.0
    %1350 = vmatpush2.msra.mxu0 0.0
    %1351 = vmatprep.subr.mxu0 0.0
    %1352 = vmatpush2.msra.mxu0 0.0
    %1353 = vmatprep.subr.mxu0 0.0
    %1354 = vmatpush2.msra.mxu0 0.0
    %1355 = vmatprep.subr.mxu0 0.0
    %1356 = vmatpush2.msra.mxu0 0.0
    %1357 = vmatprep.subr.mxu0 0.0
    %1358 = vmatpush2.msra.mxu0 0.0
    %1359 = vmatprep.mubr.f32.mxu0 0.0
    %v1360 = vand.u32 %v1117, 4294901760
    %v1361 = vsub.f32 %v1117, %v1360
    %1362 = vmatmul.mubr.f32.gmra.mxu0 %v1361
    %v1363 = vpop.f32.mrf.mxu0
    %v1364 = vadd.f32 %v1284, %v1363
    %v1365 = vpop.f32.mrf.mxu0
    %1366 = vmatprep.mubr.f32.mxu0 0.0
    %v1367 = vand.u32 %v1120, 4294901760
    %v1368 = vsub.f32 %v1120, %v1367
    %1369 = vmatmul.mubr.f32.gmra.mxu0 %v1368
    %v1370 = vpop.f32.mrf.mxu0
    %v1371 = vadd.f32 %v1290, %v1370
    %v1372 = vpop.f32.mrf.mxu0
    %1373 = vdwg.mxu0
    %1374 = vmatprep.subr.mxu0 0.0
    %1375 = vmatpush1.msra.mxu0 0.0
    %1376 = vmatprep.subr.mxu0 0.0
    %1377 = vmatpush1.msra.mxu0 0.0
    %1378 = vmatprep.subr.mxu0 0.0
    %1379 = vmatpush1.msra.mxu0 0.0
    %1380 = vmatprep.subr.mxu0 0.0
    %1381 = vmatpush1.msra.mxu0 0.0
    %1382 = vmatprep.subr.mxu0 0.0
    %1383 = vmatpush1.msra.mxu0 0.0
    %1384 = vmatprep.subr.mxu0 0.0
    %1385 = vmatpush1.msra.mxu0 0.0
    %1386 = vmatprep.subr.mxu0 0.0
    %1387 = vmatpush1.msra.mxu0 0.0
    %1388 = vmatprep.subr.mxu0 0.0
    %1389 = vmatpush1.msra.mxu0 0.0
    %1390 = vmatprep.subr.mxu0 0.0
    %1391 = vmatpush1.msra.mxu0 0.0
    %1392 = vmatprep.subr.mxu0 0.0
    %1393 = vmatpush1.msra.mxu0 0.0
    %1394 = vmatprep.subr.mxu0 0.0
    %1395 = vmatpush1.msra.mxu0 0.0
    %1396 = vmatprep.subr.mxu0 0.0
    %1397 = vmatpush1.msra.mxu0 0.0
    %1398 = vmatprep.subr.mxu0 0.0
    %1399 = vmatpush1.msra.mxu0 0.0
    %1400 = vmatprep.subr.mxu0 0.0
    %1401 = vmatpush1.msra.mxu0 0.0
    %1402 = vmatprep.subr.mxu0 0.0
    %1403 = vmatpush1.msra.mxu0 0.0
    %1404 = vmatprep.subr.mxu0 0.0
    %v1405 = vand.u32 %v1123, 4294901760
    %1406 = vmatpush1.msra.mxu0 %v1405
    %1407 = vmatprep.subr.mxu0 0.0
    %1408 = vmatpush2.msra.mxu0 0.0
    %1409 = vmatprep.subr.mxu0 0.0
    %1410 = vmatpush2.msra.mxu0 0.0
    %1411 = vmatprep.subr.mxu0 0.0
    %1412 = vmatpush2.msra.mxu0 0.0
    %1413 = vmatprep.subr.mxu0 0.0
    %1414 = vmatpush2.msra.mxu0 0.0
    %1415 = vmatprep.subr.mxu0 0.0
    %1416 = vmatpush2.msra.mxu0 0.0
    %1417 = vmatprep.subr.mxu0 0.0
    %1418 = vmatpush2.msra.mxu0 0.0
    %1419 = vmatprep.subr.mxu0 0.0
    %1420 = vmatpush2.msra.mxu0 0.0
    %1421 = vmatprep.subr.mxu0 0.0
    %1422 = vmatpush2.msra.mxu0 0.0
    %1423 = vmatprep.subr.mxu0 0.0
    %1424 = vmatpush2.msra.mxu0 0.0
    %1425 = vmatprep.subr.mxu0 0.0
    %1426 = vmatpush2.msra.mxu0 0.0
    %1427 = vmatprep.subr.mxu0 0.0
    %1428 = vmatpush2.msra.mxu0 0.0
    %1429 = vmatprep.subr.mxu0 0.0
    %1430 = vmatpush2.msra.mxu0 0.0
    %1431 = vmatprep.subr.mxu0 0.0
    %1432 = vmatpush2.msra.mxu0 0.0
    %1433 = vmatprep.subr.mxu0 0.0
    %1434 = vmatpush2.msra.mxu0 0.0
    %1435 = vmatprep.subr.mxu0 0.0
    %1436 = vmatpush2.msra.mxu0 0.0
    %1437 = vmatprep.subr.mxu0 0.0
    %1438 = vmatpush2.msra.mxu0 0.0
    %1439 = vmatprep.mubr.f32.mxu0 0.0
    %v1440 = vand.u32 %v1117, 4294901760
    %v1441 = vsub.f32 %v1117, %v1440
    %v1442 = vand.u32 %v1441, 4294901760
    %1443 = vmatmul.mubr.f32.gmra.mxu0 %v1442
    %v1444 = vpop.f32.mrf.mxu0
    %v1445 = vadd.f32 %v1364, %v1444
    %v1446 = vpop.f32.mrf.mxu0
    %1447 = vmatprep.mubr.f32.mxu0 0.0
    %v1448 = vand.u32 %v1120, 4294901760
    %v1449 = vsub.f32 %v1120, %v1448
    %v1450 = vand.u32 %v1449, 4294901760
    %1451 = vmatmul.mubr.f32.gmra.mxu0 %v1450
    %v1452 = vpop.f32.mrf.mxu0
    %v1453 = vadd.f32 %v1371, %v1452
    %v1454 = vpop.f32.mrf.mxu0
    %1455 = vdwg.mxu0
    %1456 = vmatprep.subr.mxu0 0.0
    %1457 = vmatpush1.msra.mxu0 0.0
    %1458 = vmatprep.subr.mxu0 0.0
    %1459 = vmatpush1.msra.mxu0 0.0
    %1460 = vmatprep.subr.mxu0 0.0
    %1461 = vmatpush1.msra.mxu0 0.0
    %1462 = vmatprep.subr.mxu0 0.0
    %1463 = vmatpush1.msra.mxu0 0.0
    %1464 = vmatprep.subr.mxu0 0.0
    %1465 = vmatpush1.msra.mxu0 0.0
    %1466 = vmatprep.subr.mxu0 0.0
    %1467 = vmatpush1.msra.mxu0 0.0
    %1468 = vmatprep.subr.mxu0 0.0
    %1469 = vmatpush1.msra.mxu0 0.0
    %1470 = vmatprep.subr.mxu0 0.0
    %1471 = vmatpush1.msra.mxu0 0.0
    %1472 = vmatprep.subr.mxu0 0.0
    %1473 = vmatpush1.msra.mxu0 0.0
    %1474 = vmatprep.subr.mxu0 0.0
    %1475 = vmatpush1.msra.mxu0 0.0
    %1476 = vmatprep.subr.mxu0 0.0
    %1477 = vmatpush1.msra.mxu0 0.0
    %1478 = vmatprep.subr.mxu0 0.0
    %1479 = vmatpush1.msra.mxu0 0.0
    %1480 = vmatprep.subr.mxu0 0.0
    %1481 = vmatpush1.msra.mxu0 0.0
    %1482 = vmatprep.subr.mxu0 0.0
    %1483 = vmatpush1.msra.mxu0 0.0
    %1484 = vmatprep.subr.mxu0 0.0
    %1485 = vmatpush1.msra.mxu0 0.0
    %1486 = vmatprep.subr.mxu0 0.0
    %v1487 = vand.u32 %v1123, 4294901760
    %v1488 = vsub.f32 %v1123, %v1487
    %v1489 = vand.u32 %v1488, 4294901760
    %1490 = vmatpush1.msra.mxu0 %v1489
    %1491 = vmatprep.subr.mxu0 0.0
    %1492 = vmatpush2.msra.mxu0 0.0
    %1493 = vmatprep.subr.mxu0 0.0
    %1494 = vmatpush2.msra.mxu0 0.0
    %1495 = vmatprep.subr.mxu0 0.0
    %1496 = vmatpush2.msra.mxu0 0.0
    %1497 = vmatprep.subr.mxu0 0.0
    %1498 = vmatpush2.msra.mxu0 0.0
    %1499 = vmatprep.subr.mxu0 0.0
    %1500 = vmatpush2.msra.mxu0 0.0
    %1501 = vmatprep.subr.mxu0 0.0
    %1502 = vmatpush2.msra.mxu0 0.0
    %1503 = vmatprep.subr.mxu0 0.0
    %1504 = vmatpush2.msra.mxu0 0.0
    %1505 = vmatprep.subr.mxu0 0.0
    %1506 = vmatpush2.msra.mxu0 0.0
    %1507 = vmatprep.subr.mxu0 0.0
    %1508 = vmatpush2.msra.mxu0 0.0
    %1509 = vmatprep.subr.mxu0 0.0
    %1510 = vmatpush2.msra.mxu0 0.0
    %1511 = vmatprep.subr.mxu0 0.0
    %1512 = vmatpush2.msra.mxu0 0.0
    %1513 = vmatprep.subr.mxu0 0.0
    %1514 = vmatpush2.msra.mxu0 0.0
    %1515 = vmatprep.subr.mxu0 0.0
    %1516 = vmatpush2.msra.mxu0 0.0
    %1517 = vmatprep.subr.mxu0 0.0
    %1518 = vmatpush2.msra.mxu0 0.0
    %1519 = vmatprep.subr.mxu0 0.0
    %1520 = vmatpush2.msra.mxu0 0.0
    %1521 = vmatprep.subr.mxu0 0.0
    %1522 = vmatpush2.msra.mxu0 0.0
    %1523 = vmatprep.mubr.f32.mxu0 0.0
    %v1524 = vand.u32 %v1117, 4294901760
    %1525 = vmatmul.mubr.f32.gmra.mxu0 %v1524
    %v1526 = vpop.f32.mrf.mxu0
    %v1527 = vadd.f32 %v1445, %v1526
    %v1528 = vpop.f32.mrf.mxu0
    %1529 = vmatprep.mubr.f32.mxu0 0.0
    %v1530 = vand.u32 %v1120, 4294901760
    %1531 = vmatmul.mubr.f32.gmra.mxu0 %v1530
    %v1532 = vpop.f32.mrf.mxu0
    %v1533 = vadd.f32 %v1453, %v1532
    %v1534 = vpop.f32.mrf.mxu0
    %1535 = vdwg.mxu0
    %1536 = vmatprep.subr.mxu0 0.0
    %1537 = vmatpush1.msra.mxu0 0.0
    %1538 = vmatprep.subr.mxu0 0.0
    %1539 = vmatpush1.msra.mxu0 0.0
    %1540 = vmatprep.subr.mxu0 0.0
    %1541 = vmatpush1.msra.mxu0 0.0
    %1542 = vmatprep.subr.mxu0 0.0
    %1543 = vmatpush1.msra.mxu0 0.0
    %1544 = vmatprep.subr.mxu0 0.0
    %1545 = vmatpush1.msra.mxu0 0.0
    %1546 = vmatprep.subr.mxu0 0.0
    %1547 = vmatpush1.msra.mxu0 0.0
    %1548 = vmatprep.subr.mxu0 0.0
    %1549 = vmatpush1.msra.mxu0 0.0
    %1550 = vmatprep.subr.mxu0 0.0
    %1551 = vmatpush1.msra.mxu0 0.0
    %1552 = vmatprep.subr.mxu0 0.0
    %1553 = vmatpush1.msra.mxu0 0.0
    %1554 = vmatprep.subr.mxu0 0.0
    %1555 = vmatpush1.msra.mxu0 0.0
    %1556 = vmatprep.subr.mxu0 0.0
    %1557 = vmatpush1.msra.mxu0 0.0
    %1558 = vmatprep.subr.mxu0 0.0
    %1559 = vmatpush1.msra.mxu0 0.0
    %1560 = vmatprep.subr.mxu0 0.0
    %1561 = vmatpush1.msra.mxu0 0.0
    %1562 = vmatprep.subr.mxu0 0.0
    %1563 = vmatpush1.msra.mxu0 0.0
    %1564 = vmatprep.subr.mxu0 0.0
    %1565 = vmatpush1.msra.mxu0 0.0
    %1566 = vmatprep.subr.mxu0 0.0
    %v1567 = vand.u32 %v1123, 4294901760
    %1568 = vmatpush1.msra.mxu0 %v1567
    %1569 = vmatprep.subr.mxu0 0.0
    %1570 = vmatpush2.msra.mxu0 0.0
    %1571 = vmatprep.subr.mxu0 0.0
    %1572 = vmatpush2.msra.mxu0 0.0
    %1573 = vmatprep.subr.mxu0 0.0
    %1574 = vmatpush2.msra.mxu0 0.0
    %1575 = vmatprep.subr.mxu0 0.0
    %1576 = vmatpush2.msra.mxu0 0.0
    %1577 = vmatprep.subr.mxu0 0.0
    %1578 = vmatpush2.msra.mxu0 0.0
    %1579 = vmatprep.subr.mxu0 0.0
    %1580 = vmatpush2.msra.mxu0 0.0
    %1581 = vmatprep.subr.mxu0 0.0
    %1582 = vmatpush2.msra.mxu0 0.0
    %1583 = vmatprep.subr.mxu0 0.0
    %1584 = vmatpush2.msra.mxu0 0.0
    %1585 = vmatprep.subr.mxu0 0.0
    %1586 = vmatpush2.msra.mxu0 0.0
    %1587 = vmatprep.subr.mxu0 0.0
    %1588 = vmatpush2.msra.mxu0 0.0
    %1589 = vmatprep.subr.mxu0 0.0
    %1590 = vmatpush2.msra.mxu0 0.0
    %1591 = vmatprep.subr.mxu0 0.0
    %1592 = vmatpush2.msra.mxu0 0.0
    %1593 = vmatprep.subr.mxu0 0.0
    %1594 = vmatpush2.msra.mxu0 0.0
    %1595 = vmatprep.subr.mxu0 0.0
    %1596 = vmatpush2.msra.mxu0 0.0
    %1597 = vmatprep.subr.mxu0 0.0
    %1598 = vmatpush2.msra.mxu0 0.0
    %1599 = vmatprep.subr.mxu0 0.0
    %1600 = vmatpush2.msra.mxu0 0.0
    %1601 = vmatprep.mubr.f32.mxu0 0.0
    %v1602 = vand.u32 %v1117, 4294901760
    %1603 = vmatmul.mubr.f32.gmra.mxu0 %v1602
    %v1604 = vpop.f32.mrf.mxu0
    %v1605 = vadd.f32 %v1527, %v1604
    %v1606 = vpop.f32.mrf.mxu0
    %1607 = vmatprep.mubr.f32.mxu0 0.0
    %v1608 = vand.u32 %v1120, 4294901760
    %1609 = vmatmul.mubr.f32.gmra.mxu0 %v1608
    %v1610 = vpop.f32.mrf.mxu0
    %v1611 = vadd.f32 %v1533, %v1610
    %v1612 = vpop.f32.mrf.mxu0
    %1613 = vdwg.mxu0
    %v1614 = vadd.f32 %v1103, %v1605
    %v1615 = vadd.f32 %v1109, %v1611
    %v1616 = vld [vmem:[%s6] sm:$0x1]
    %v1618 = vlaneseq
    %v1619 = vshrl.u32 %v1618, 7
    %v1620 = vsub.s32 0, %v1619
    %v1621 = vrot.slane %v1616, %v1620
    %v1623 = vadd.f32 %v1614, %v1621
    %v1624 = vadd.f32 %v1615, %v1621
    %1625 = vst [vmem:[#allocation8] sm:$0xff] %v1623
    %1626 = vst [vmem:[#allocation8 + $0x8] sm:$0xff] %v1624
    // Predicated region
    $region42: #{tpu_custom_call.1} parent=1 // pred_check
      _
    $region43: #{tpu_custom_call.1} parent=1 // pred_check_branch
      %1628 = sbr.rel (0) target = $region45
    $region44: #{tpu_custom_call.1} parent=1 // pred_region
      %s1630 = ssub.s32 256, 256
      %1631 = vsyncadd [#allocation4], %s1630
      %s1632 = sshll.u32 [#allocation8], 4
      %s1633 = int_to_ptr.vmem [resolvable:$true] %s1632
      %1638 = dma.vmem_to_hbm [thread:$0]  %s1633, 256, %s7, [#allocation4], 128, 128, 8
    $region45: #{tpu_custom_call.1} parent=1 // pred_fallthru
      _
    // Predicated region
    $region46: #{tpu_custom_call.1} parent=1 // pred_check
      _
    $region47: #{tpu_custom_call.1} parent=1 // pred_check_branch
      %1640 = sbr.rel (0) target = $region49
    $region48: #{tpu_custom_call.1} parent=1 // pred_region
      %1641 = dma.done [#allocation4], 256
    $region49: #{tpu_custom_call.1} parent=1 // pred_fallthru
      _
    %1642 = vsyncpa [#allocation3], 1
    %1643 = vsyncpa [#allocation6], 1
    %1644 = vsyncpa [#allocation4], 1

</llo_original>
